<compile_context>
chip_gen: v7x
topology: tpu7x:2x2x1
jax: 0.10.0
libtpu: 0.0.40
codegen_flags: <defaults>
</compile_context>

<pallas_src>
import jax
import jax.numpy as jnp
import numpy as np
from jax import lax
from jax.experimental import pallas as pl
from jax.experimental.pallas import tpu as pltpu

_LANE = 128
_SUB = 8


def _make_hails_kernel(seq_len, s_chunk, pred_pad, unroll):
    S = seq_len      # original sequence length (seq_last lives at row S-1)
    Sc = s_chunk     # weight rows processed per "arbitrary" grid step
    Pp = pred_pad    # padded pred_len (multiple of 8)

    def kernel(x_ref, w_ref, b_ref, shift_ref, g_ref, wmt_ref, out_ref, acc_ref):
        # Block shapes (Np = node count padded to 128 lanes, TP = 2*Pp):
        #   x_ref     : (Bt, S_pad, Np)  input, native (Batch, Time, Node) layout, N on lanes
        #   w_ref     : (Sc, TP, Np)     NLinear weight chunk, w[s, t, n] = torch_W[n, t, s]
        #   b_ref     : (TP, Np)         NLinear bias (mu rows [0,P), logstd rows [Pp,Pp+P))
        #   shift_ref : (TP, Np)         (1 - sum_s W[s,t,n]) on real rows, 0 on padded rows
        #   g_ref     : (1, Np)          pre-activated Corem gate sigmoid(c * gamma_raw)
        #   wmt_ref   : (Np, Np)         softmax(wmix, -1) transposed (zero pad rows/cols)
        #   out_ref   : (Bt, TP, Np)     fused [mu_new ; logstd_new] along the time axis
        #   acc_ref   : (Bt, TP, Np) f32 scratch accumulator across the S-chunk axis
        k = pl.program_id(1)
        nk = pl.num_programs(1)
        Bt, _, Np = x_ref.shape
        TP = 2 * Pp

        @pl.when(k == 0)
        def _():
            acc_ref[...] = jnp.zeros_like(acc_ref)

        base = k * Sc

        # NLinear contraction over seq: Sc lane-dense rank-1 updates of a (Bt, TP, Np)
        # accumulator. seq_last is folded out of the loop (added via shift_ref in the epilogue).
        # TODO(synk): a stride-0 sublane-broadcast load of the x row could move this broadcast
        # onto the (idle) vld slots.
        def body(s, acc):
            xs = x_ref[:, pl.ds(base + s, 1), :]          # (Bt, 1, Np)
            ws = w_ref[s]                                 # (TP, Np)
            return acc + xs * ws[None]                    # (Bt, TP, Np)

        acc = lax.fori_loop(0, Sc, body, acc_ref[...], unroll=unroll)

        @pl.when(k + 1 < nk)
        def _():
            acc_ref[...] = acc

        @pl.when(k + 1 == nk)
        def _():
            seq_last = x_ref[:, S - 1:S, :]               # (Bt, 1, Np)
            out = acc + b_ref[...][None] + seq_last * shift_ref[...][None]   # (Bt, TP, Np)

            mu = out[:, :Pp, :]                           # (Bt, Pp, Np)
            var = jnp.exp(2.0 * out[:, Pp:, :])           # (Bt, Pp, Np)  (no concatenate)

            # Corem node mixing: two lane-contracting 2-D MXU matmuls (K = N = Np, aligned).
            wmt = wmt_ref[...]
            agg_mu = jnp.dot(mu.reshape(Bt * Pp, Np), wmt,
                             preferred_element_type=jnp.float32).reshape(Bt, Pp, Np)
            agg_var = jnp.dot(var.reshape(Bt * Pp, Np), wmt,
                              preferred_element_type=jnp.float32).reshape(Bt, Pp, Np)

            g = g_ref[...][None]                          # (1, 1, Np)
            omg = 1.0 - g
            mu_new = g * mu + omg * agg_mu
            var_new = (g * g) * var + (omg * omg) * agg_var

            # Two sublane-aligned sub-slice stores (Pp is a multiple of 8) — no concatenate.
            out_ref[:, :Pp, :] = mu_new.astype(out_ref.dtype)
            out_ref[:, Pp:, :] = (0.5 * jnp.log(var_new)).astype(out_ref.dtype)

    return kernel


def _round_up(x, m):
    return ((x + m - 1) // m) * m


def _pick_batch_tile(batch, twop_pad, n_pad, max_vregs=32, max_tile=64):
    """Rows per grid step: amortize the ~0.35us/step overhead, keep the live f32 accumulator
    within ~max_vregs vregs, and leave >=2 batch steps when possible (feed both v7x TCs)."""
    per_row = max(1, (twop_pad // _SUB) * (n_pad // _LANE))
    bt = max(1, min(batch, max_tile, max_vregs // per_row))
    if batch >= 2:
        bt = min(bt, -(-batch // 2))
    return bt


def _pick_s_chunk(seq_len, twop_pad, n_pad, budget_bytes=8 << 20):
    """Stream the NLinear weight over an 'arbitrary' grid axis so the resident f32 weight chunk
    stays under ~8 MiB (comfortable even against v7x's 64 MiB VMEM)."""
    row_bytes = twop_pad * n_pad * 4
    rows = max(1, budget_bytes // row_bytes)
    if rows >= seq_len:
        return seq_len, 1
    sc = max(_SUB, (rows // _SUB) * _SUB)
    return sc, -(-seq_len // sc)


def _vmem_limit_bytes(block_bytes_total):
    """Derive vmem_limit_bytes from the actual padded block footprint and the chip's capacity."""
    try:
        cap = int(pltpu.get_tpu_info().vmem_capacity_bytes)
    except Exception:
        cap = 64 << 20  # conservative default: v7x per-core VMEM
    limit = max(block_bytes_total + (4 << 20), 16 << 20)
    return int(min(limit, int(cap * 0.9)))


def hails_univ_forward(x, params, *, pred_len, corem_c):
    """x: (B, seq_len, num_nodes) f32 -> (mu_new, logstd_new), each (B, pred_len, num_nodes)."""
    B, S, N = x.shape
    P = pred_len
    f32 = jnp.float32

    Np = _round_up(N, _LANE)     # lane-pad nodes: full vregs, unmasked stores, MXU K aligned
    Pp = _round_up(P, _SUB)      # sublane-pad pred_len: mu/logstd halves are 8-aligned
    TP = 2 * Pp

    Sc, n_chunks = _pick_s_chunk(S, TP, Np)
    S_pad = Sc * n_chunks
    Bt = _pick_batch_tile(B, TP, Np)
    grid_b = -(-B // Bt)
    B_pad = grid_b * Bt

    # ---- batch-invariant parameter transforms, hoisted out of the kernel (computed once) ----
    w_k = jnp.transpose(params["lin_w"], (2, 1, 0)).astype(f32)        # (S, 2P, N)
    b_k = jnp.transpose(params["lin_b"], (1, 0)).astype(f32)           # (2P, N)
    shift_k = 1.0 - jnp.sum(w_k, axis=0)                               # (2P, N): 1 - sum_s W
    g_k = jax.nn.sigmoid(float(corem_c) * params["gamma_raw"][:, 0]).astype(f32)     # (N,)
    wmt_k = jnp.transpose(jax.nn.softmax(params["wmix_raw"].astype(f32), axis=-1))   # (N, N)

    # mu head -> rows [0, P), logstd head -> rows [Pp, Pp+P). Pad rows/nodes are zero so padded
    # outputs stay finite and padded nodes contribute nothing to the mixing dot.
    def pad_heads(a):  # (2P, N) -> (TP, Np)
        o = jnp.zeros((TP, Np), f32)
        o = o.at[:P, :N].set(a[:P])
        return o.at[Pp:Pp + P, :N].set(a[P:])

    b_pad = pad_heads(b_k)
    shift_pad = pad_heads(shift_k)
    w_pad = jnp.zeros((S_pad, TP, Np), f32)
    w_pad = w_pad.at[:S, :P, :N].set(w_k[:, :P])
    w_pad = w_pad.at[:S, Pp:Pp + P, :N].set(w_k[:, P:])
    g_pad = jnp.ones((1, Np), f32).at[0, :N].set(g_k)          # gate=1 on pad nodes -> finite
    wmt_pad = jnp.zeros((Np, Np), f32).at[:N, :N].set(wmt_k)
    x_pad = jnp.zeros((B_pad, S_pad, Np), f32).at[:B, :S, :N].set(x.astype(f32))

    # ---- VMEM budget from the actual padded block sizes -------------------------------------
    bpe = 4
    x_blk = Bt * S_pad * Np * bpe
    out_blk = Bt * TP * Np * bpe
    w_blk = Sc * TP * Np * bpe
    const_blk = (2 * TP * Np + Np + Np * Np) * bpe
    acc_blk = Bt * TP * Np * bpe
    vmem_limit = _vmem_limit_bytes(
        2 * (x_blk + out_blk + w_blk + const_blk) + acc_blk + 8 * out_blk)

    kernel = _make_hails_kernel(S, Sc, Pp, unroll=(True if Sc <= 32 else 8))

    def call(single_buffer_consts):
        def const_spec(shape):
            if single_buffer_consts:
                return pl.BlockSpec(shape, lambda b, k: (0,) * len(shape),
                                    pipeline_mode=pl.Buffered(1))
            return pl.BlockSpec(shape, lambda b, k: (0,) * len(shape))

        if single_buffer_consts and n_chunks == 1:
            w_spec = pl.BlockSpec((Sc, TP, Np), lambda b, k: (k, 0, 0),
                                  pipeline_mode=pl.Buffered(1))
        else:
            w_spec = pl.BlockSpec((Sc, TP, Np), lambda b, k: (k, 0, 0))

        return pl.pallas_call(
            kernel,
            out_shape=jax.ShapeDtypeStruct((B_pad, TP, Np), f32),
            grid=(grid_b, n_chunks),
            in_specs=[
                pl.BlockSpec((Bt, S_pad, Np), lambda b, k: (b, 0, 0)),   # x batch tile
                w_spec,                                                  # weight (streamed)
                const_spec((TP, Np)),                                    # bias
                const_spec((TP, Np)),                                    # seq_last shift coeff
                const_spec((1, Np)),                                     # Corem gate
                const_spec((Np, Np)),                                    # softmax(wmix)^T
            ],
            out_specs=pl.BlockSpec((Bt, TP, Np), lambda b, k: (b, 0, 0)),
            scratch_shapes=[pltpu.VMEM((Bt, TP, Np), jnp.float32)],
            compiler_params=pltpu.CompilerParams(
                dimension_semantics=("parallel", "arbitrary"),
                vmem_limit_bytes=vmem_limit,
            ),
        )(x_pad, w_pad, b_pad, shift_pad, g_pad, wmt_pad)

    try:
        fused = call(True)
    except Exception:
        # TODO(synk): pl.Buffered(1) single-buffering rejected on this jax version; fall back
        # to default double-buffering of the grid-invariant blocks.
        fused = call(False)

    # Slice padded lanes / pred rows / batch rows back out in the wrapper (cheap XLA slices).
    return fused[:B, :P, :N], fused[:B, Pp:Pp + P, :N]


def hails_univ_reference(x, params, *, pred_len, corem_c):
    """Plain-JAX reference mirroring the PyTorch forward semantics (B, T, N layout)."""
    P = pred_len
    W, bias, gamma_raw, wmix_raw = (
        params["lin_w"], params["lin_b"], params["gamma_raw"], params["wmix_raw"])

    # NLinear (individual=True, dim_out=2)
    seq_last = x[:, -1:, :]                                        # (B, 1, N)
    xc = x - seq_last
    out = jnp.einsum("bsn,nts->btn", xc, W) + jnp.transpose(bias)[None]  # (B, 2P, N)
    out = out + seq_last
    mu, logstd = out[:, :P, :], out[:, P:, :]

    # Corem.predict
    g = jax.nn.sigmoid(corem_c * gamma_raw[:, 0])                  # (N,)
    wm = jax.nn.softmax(wmix_raw, axis=-1)                         # (N, N)
    var = jnp.exp(2.0 * logstd)
    agg_mu = jnp.einsum("ij,btj->bti", wm, mu)
    agg_var = jnp.einsum("ij,btj->bti", wm, var)
    mu_new = g * mu + (1.0 - g) * agg_mu
    var_new = g * g * var + (1.0 - g) * (1.0 - g) * agg_var
    return mu_new, 0.5 * jnp.log(var_new)


def init_params(key, num_nodes, seq_len, pred_len):
    k1, k2, k3, k4 = jax.random.split(key, 4)
    return {
        "lin_w": 0.1 * jax.random.normal(k1, (num_nodes, 2 * pred_len, seq_len), jnp.float32),
        "lin_b": 0.01 * jax.random.normal(k2, (num_nodes, 2 * pred_len), jnp.float32),
        "gamma_raw": jax.random.normal(k3, (num_nodes, 1), jnp.float32),
        "wmix_raw": 0.5 * jax.random.normal(k4, (num_nodes, num_nodes), jnp.float32),
    }


if __name__ == "__main__":
    # Small, forward-consistent shapes: [Batch, Seq length, Num Nodes]
    B, SEQ_LEN, PRED_LEN, NUM_NODES, COREM_C = 2, 16, 8, 8, 5

    key = jax.random.PRNGKey(0)
    kx, kp = jax.random.split(key)
    x = jax.random.normal(kx, (B, SEQ_LEN, NUM_NODES), jnp.float32)
    params = init_params(kp, NUM_NODES, SEQ_LEN, PRED_LEN)

    mu_new, logstd_new = hails_univ_forward(
        x, params, pred_len=PRED_LEN, corem_c=COREM_C)
    mu_new = jax.block_until_ready(mu_new)
    logstd_new = jax.block_until_ready(logstd_new)

    mu_ref, logstd_ref = hails_univ_reference(
        x, params, pred_len=PRED_LEN, corem_c=COREM_C)

    assert mu_new.shape == (B, PRED_LEN, NUM_NODES)
    assert logstd_new.shape == (B, PRED_LEN, NUM_NODES)
    np.testing.assert_allclose(np.asarray(mu_new), np.asarray(mu_ref), rtol=5e-5, atol=5e-5)
    np.testing.assert_allclose(np.asarray(logstd_new), np.asarray(logstd_ref), rtol=5e-5, atol=5e-5)

    print("KERNEL_OK")
</pallas_src>

<mosaic_0001>
module attributes {stable_mosaic.version = 11 : i64} {
  func.func @kernel(%arg0: i32, %arg1: i32, %arg2: memref<1x16x128xf32, #tpu.memory_space<vmem>>, %arg3: memref<16x16x128xf32, #tpu.memory_space<vmem>>, %arg4: memref<16x128xf32, #tpu.memory_space<vmem>>, %arg5: memref<16x128xf32, #tpu.memory_space<vmem>>, %arg6: memref<1x128xf32, #tpu.memory_space<vmem>>, %arg7: memref<128x128xf32, #tpu.memory_space<vmem>>, %arg8: memref<1x16x128xf32, #tpu.memory_space<vmem>>, %arg9: memref<1x16x128xf32, #tpu.memory_space<vmem>>) attributes {dimension_semantics = [#tpu.dimension_semantics<parallel>, #tpu.dimension_semantics<arbitrary>], iteration_bounds = array<i64: 2, 1>, scalar_prefetch = 0 : i64, scratch_operands = 1 : i64, tpu.core_type = #tpu.core_type<tc>, window_params = [{transform_indices = @transform_0, window_bounds = array<i64: 1, 16, 128>}, {pipeline_mode = #tpu.pipeline_mode<synchronous>, transform_indices = @transform_1, window_bounds = array<i64: 16, 16, 128>}, {pipeline_mode = #tpu.pipeline_mode<synchronous>, transform_indices = @transform_2, window_bounds = array<i64: 16, 128>}, {pipeline_mode = #tpu.pipeline_mode<synchronous>, transform_indices = @transform_3, window_bounds = array<i64: 16, 128>}, {pipeline_mode = #tpu.pipeline_mode<synchronous>, transform_indices = @transform_4, window_bounds = array<i64: 1, 128>}, {pipeline_mode = #tpu.pipeline_mode<synchronous>, transform_indices = @transform_5, window_bounds = array<i64: 128, 128>}, {transform_indices = @transform_6, window_bounds = array<i64: 1, 16, 128>}]} {
    %c0_i32 = arith.constant 0 : i32
    %0 = arith.cmpi eq, %arg1, %c0_i32 : i32
    %1 = arith.extui %0 : i1 to i32
    %c0_i32_0 = arith.constant 0 : i32
    %2 = arith.cmpi ne, %1, %c0_i32_0 : i32
    scf.if %2 {
      %cst = arith.constant 0.000000e+00 : f32
      %173 = vector.broadcast %cst : f32 to vector<1x16x128xf32>
      %c0_75 = arith.constant 0 : index
      %c0_76 = arith.constant 0 : index
      %c0_77 = arith.constant 0 : index
      %174 = vector.load %arg9[%c0_75, %c0_76, %c0_77] : memref<1x16x128xf32, #tpu.memory_space<vmem>>, vector<1x16x128xf32>
      tpu.vector_store %arg9[%c0_75, %c0_76, %c0_77], %173 {strides = array<i32>} : memref<1x16x128xf32, #tpu.memory_space<vmem>>, vector<1x16x128xf32>,
    } else {
    }
    %c16_i32 = arith.constant 16 : i32
    %3 = arith.muli %arg1, %c16_i32 : i32
    %c0 = arith.constant 0 : index
    %c0_1 = arith.constant 0 : index
    %c0_2 = arith.constant 0 : index
    %4 = vector.load %arg9[%c0, %c0_1, %c0_2] : memref<1x16x128xf32, #tpu.memory_space<vmem>>, vector<1x16x128xf32>
    %c0_i32_3 = arith.constant 0 : i32
    %5 = arith.addi %3, %c0_i32_3 : i32
    %c0_4 = arith.constant 0 : index
    %6 = arith.index_cast %5 : i32 to index
    %c0_5 = arith.constant 0 : index
    %7 = vector.load %arg2[%c0_4, %6, %c0_5] : memref<1x16x128xf32, #tpu.memory_space<vmem>>, vector<1x1x128xf32>
    %8 = arith.index_cast %c0_i32_3 : i32 to index
    %c0_6 = arith.constant 0 : index
    %c0_7 = arith.constant 0 : index
    %9 = vector.load %arg3[%8, %c0_6, %c0_7] : memref<16x16x128xf32, #tpu.memory_space<vmem>>, vector<1x16x128xf32>
    %10 = vector.shape_cast %9 : vector<1x16x128xf32> to vector<16x128xf32>
    %11 = vector.shape_cast %10 : vector<16x128xf32> to vector<1x16x128xf32>
    %12 = vector.broadcast %7 : vector<1x1x128xf32> to vector<1x16x128xf32>
    %13 = arith.mulf %12, %11 : vector<1x16x128xf32>
    %14 = arith.addf %4, %13 : vector<1x16x128xf32>
    %c1_i32 = arith.constant 1 : i32
    %15 = arith.addi %3, %c1_i32 : i32
    %c0_8 = arith.constant 0 : index
    %16 = arith.index_cast %15 : i32 to index
    %c0_9 = arith.constant 0 : index
    %17 = vector.load %arg2[%c0_8, %16, %c0_9] : memref<1x16x128xf32, #tpu.memory_space<vmem>>, vector<1x1x128xf32>
    %18 = arith.index_cast %c1_i32 : i32 to index
    %c0_10 = arith.constant 0 : index
    %c0_11 = arith.constant 0 : index
    %19 = vector.load %arg3[%18, %c0_10, %c0_11] : memref<16x16x128xf32, #tpu.memory_space<vmem>>, vector<1x16x128xf32>
    %20 = vector.shape_cast %19 : vector<1x16x128xf32> to vector<16x128xf32>
    %21 = vector.shape_cast %20 : vector<16x128xf32> to vector<1x16x128xf32>
    %22 = vector.broadcast %17 : vector<1x1x128xf32> to vector<1x16x128xf32>
    %23 = arith.mulf %22, %21 : vector<1x16x128xf32>
    %24 = arith.addf %14, %23 : vector<1x16x128xf32>
    %c2_i32 = arith.constant 2 : i32
    %25 = arith.addi %3, %c2_i32 : i32
    %c0_12 = arith.constant 0 : index
    %26 = arith.index_cast %25 : i32 to index
    %c0_13 = arith.constant 0 : index
    %27 = vector.load %arg2[%c0_12, %26, %c0_13] : memref<1x16x128xf32, #tpu.memory_space<vmem>>, vector<1x1x128xf32>
    %28 = arith.index_cast %c2_i32 : i32 to index
    %c0_14 = arith.constant 0 : index
    %c0_15 = arith.constant 0 : index
    %29 = vector.load %arg3[%28, %c0_14, %c0_15] : memref<16x16x128xf32, #tpu.memory_space<vmem>>, vector<1x16x128xf32>
    %30 = vector.shape_cast %29 : vector<1x16x128xf32> to vector<16x128xf32>
    %31 = vector.shape_cast %30 : vector<16x128xf32> to vector<1x16x128xf32>
    %32 = vector.broadcast %27 : vector<1x1x128xf32> to vector<1x16x128xf32>
    %33 = arith.mulf %32, %31 : vector<1x16x128xf32>
    %34 = arith.addf %24, %33 : vector<1x16x128xf32>
    %c3_i32 = arith.constant 3 : i32
    %35 = arith.addi %3, %c3_i32 : i32
    %c0_16 = arith.constant 0 : index
    %36 = arith.index_cast %35 : i32 to index
    %c0_17 = arith.constant 0 : index
    %37 = vector.load %arg2[%c0_16, %36, %c0_17] : memref<1x16x128xf32, #tpu.memory_space<vmem>>, vector<1x1x128xf32>
    %38 = arith.index_cast %c3_i32 : i32 to index
    %c0_18 = arith.constant 0 : index
    %c0_19 = arith.constant 0 : index
    %39 = vector.load %arg3[%38, %c0_18, %c0_19] : memref<16x16x128xf32, #tpu.memory_space<vmem>>, vector<1x16x128xf32>
    %40 = vector.shape_cast %39 : vector<1x16x128xf32> to vector<16x128xf32>
    %41 = vector.shape_cast %40 : vector<16x128xf32> to vector<1x16x128xf32>
    %42 = vector.broadcast %37 : vector<1x1x128xf32> to vector<1x16x128xf32>
    %43 = arith.mulf %42, %41 : vector<1x16x128xf32>
    %44 = arith.addf %34, %43 : vector<1x16x128xf32>
    %c4_i32 = arith.constant 4 : i32
    %45 = arith.addi %3, %c4_i32 : i32
    %c0_20 = arith.constant 0 : index
    %46 = arith.index_cast %45 : i32 to index
    %c0_21 = arith.constant 0 : index
    %47 = vector.load %arg2[%c0_20, %46, %c0_21] : memref<1x16x128xf32, #tpu.memory_space<vmem>>, vector<1x1x128xf32>
    %48 = arith.index_cast %c4_i32 : i32 to index
    %c0_22 = arith.constant 0 : index
    %c0_23 = arith.constant 0 : index
    %49 = vector.load %arg3[%48, %c0_22, %c0_23] : memref<16x16x128xf32, #tpu.memory_space<vmem>>, vector<1x16x128xf32>
    %50 = vector.shape_cast %49 : vector<1x16x128xf32> to vector<16x128xf32>
    %51 = vector.shape_cast %50 : vector<16x128xf32> to vector<1x16x128xf32>
    %52 = vector.broadcast %47 : vector<1x1x128xf32> to vector<1x16x128xf32>
    %53 = arith.mulf %52, %51 : vector<1x16x128xf32>
    %54 = arith.addf %44, %53 : vector<1x16x128xf32>
    %c5_i32 = arith.constant 5 : i32
    %55 = arith.addi %3, %c5_i32 : i32
    %c0_24 = arith.constant 0 : index
    %56 = arith.index_cast %55 : i32 to index
    %c0_25 = arith.constant 0 : index
    %57 = vector.load %arg2[%c0_24, %56, %c0_25] : memref<1x16x128xf32, #tpu.memory_space<vmem>>, vector<1x1x128xf32>
    %58 = arith.index_cast %c5_i32 : i32 to index
    %c0_26 = arith.constant 0 : index
    %c0_27 = arith.constant 0 : index
    %59 = vector.load %arg3[%58, %c0_26, %c0_27] : memref<16x16x128xf32, #tpu.memory_space<vmem>>, vector<1x16x128xf32>
    %60 = vector.shape_cast %59 : vector<1x16x128xf32> to vector<16x128xf32>
    %61 = vector.shape_cast %60 : vector<16x128xf32> to vector<1x16x128xf32>
    %62 = vector.broadcast %57 : vector<1x1x128xf32> to vector<1x16x128xf32>
    %63 = arith.mulf %62, %61 : vector<1x16x128xf32>
    %64 = arith.addf %54, %63 : vector<1x16x128xf32>
    %c6_i32 = arith.constant 6 : i32
    %65 = arith.addi %3, %c6_i32 : i32
    %c0_28 = arith.constant 0 : index
    %66 = arith.index_cast %65 : i32 to index
    %c0_29 = arith.constant 0 : index
    %67 = vector.load %arg2[%c0_28, %66, %c0_29] : memref<1x16x128xf32, #tpu.memory_space<vmem>>, vector<1x1x128xf32>
    %68 = arith.index_cast %c6_i32 : i32 to index
    %c0_30 = arith.constant 0 : index
    %c0_31 = arith.constant 0 : index
    %69 = vector.load %arg3[%68, %c0_30, %c0_31] : memref<16x16x128xf32, #tpu.memory_space<vmem>>, vector<1x16x128xf32>
    %70 = vector.shape_cast %69 : vector<1x16x128xf32> to vector<16x128xf32>
    %71 = vector.shape_cast %70 : vector<16x128xf32> to vector<1x16x128xf32>
    %72 = vector.broadcast %67 : vector<1x1x128xf32> to vector<1x16x128xf32>
    %73 = arith.mulf %72, %71 : vector<1x16x128xf32>
    %74 = arith.addf %64, %73 : vector<1x16x128xf32>
    %c7_i32 = arith.constant 7 : i32
    %75 = arith.addi %3, %c7_i32 : i32
    %c0_32 = arith.constant 0 : index
    %76 = arith.index_cast %75 : i32 to index
    %c0_33 = arith.constant 0 : index
    %77 = vector.load %arg2[%c0_32, %76, %c0_33] : memref<1x16x128xf32, #tpu.memory_space<vmem>>, vector<1x1x128xf32>
    %78 = arith.index_cast %c7_i32 : i32 to index
    %c0_34 = arith.constant 0 : index
    %c0_35 = arith.constant 0 : index
    %79 = vector.load %arg3[%78, %c0_34, %c0_35] : memref<16x16x128xf32, #tpu.memory_space<vmem>>, vector<1x16x128xf32>
    %80 = vector.shape_cast %79 : vector<1x16x128xf32> to vector<16x128xf32>
    %81 = vector.shape_cast %80 : vector<16x128xf32> to vector<1x16x128xf32>
    %82 = vector.broadcast %77 : vector<1x1x128xf32> to vector<1x16x128xf32>
    %83 = arith.mulf %82, %81 : vector<1x16x128xf32>
    %84 = arith.addf %74, %83 : vector<1x16x128xf32>
    %c8_i32 = arith.constant 8 : i32
    %85 = arith.addi %3, %c8_i32 : i32
    %c0_36 = arith.constant 0 : index
    %86 = arith.index_cast %85 : i32 to index
    %c0_37 = arith.constant 0 : index
    %87 = vector.load %arg2[%c0_36, %86, %c0_37] : memref<1x16x128xf32, #tpu.memory_space<vmem>>, vector<1x1x128xf32>
    %88 = arith.index_cast %c8_i32 : i32 to index
    %c0_38 = arith.constant 0 : index
    %c0_39 = arith.constant 0 : index
    %89 = vector.load %arg3[%88, %c0_38, %c0_39] : memref<16x16x128xf32, #tpu.memory_space<vmem>>, vector<1x16x128xf32>
    %90 = vector.shape_cast %89 : vector<1x16x128xf32> to vector<16x128xf32>
    %91 = vector.shape_cast %90 : vector<16x128xf32> to vector<1x16x128xf32>
    %92 = vector.broadcast %87 : vector<1x1x128xf32> to vector<1x16x128xf32>
    %93 = arith.mulf %92, %91 : vector<1x16x128xf32>
    %94 = arith.addf %84, %93 : vector<1x16x128xf32>
    %c9_i32 = arith.constant 9 : i32
    %95 = arith.addi %3, %c9_i32 : i32
    %c0_40 = arith.constant 0 : index
    %96 = arith.index_cast %95 : i32 to index
    %c0_41 = arith.constant 0 : index
    %97 = vector.load %arg2[%c0_40, %96, %c0_41] : memref<1x16x128xf32, #tpu.memory_space<vmem>>, vector<1x1x128xf32>
    %98 = arith.index_cast %c9_i32 : i32 to index
    %c0_42 = arith.constant 0 : index
    %c0_43 = arith.constant 0 : index
    %99 = vector.load %arg3[%98, %c0_42, %c0_43] : memref<16x16x128xf32, #tpu.memory_space<vmem>>, vector<1x16x128xf32>
    %100 = vector.shape_cast %99 : vector<1x16x128xf32> to vector<16x128xf32>
    %101 = vector.shape_cast %100 : vector<16x128xf32> to vector<1x16x128xf32>
    %102 = vector.broadcast %97 : vector<1x1x128xf32> to vector<1x16x128xf32>
    %103 = arith.mulf %102, %101 : vector<1x16x128xf32>
    %104 = arith.addf %94, %103 : vector<1x16x128xf32>
    %c10_i32 = arith.constant 10 : i32
    %105 = arith.addi %3, %c10_i32 : i32
    %c0_44 = arith.constant 0 : index
    %106 = arith.index_cast %105 : i32 to index
    %c0_45 = arith.constant 0 : index
    %107 = vector.load %arg2[%c0_44, %106, %c0_45] : memref<1x16x128xf32, #tpu.memory_space<vmem>>, vector<1x1x128xf32>
    %108 = arith.index_cast %c10_i32 : i32 to index
    %c0_46 = arith.constant 0 : index
    %c0_47 = arith.constant 0 : index
    %109 = vector.load %arg3[%108, %c0_46, %c0_47] : memref<16x16x128xf32, #tpu.memory_space<vmem>>, vector<1x16x128xf32>
    %110 = vector.shape_cast %109 : vector<1x16x128xf32> to vector<16x128xf32>
    %111 = vector.shape_cast %110 : vector<16x128xf32> to vector<1x16x128xf32>
    %112 = vector.broadcast %107 : vector<1x1x128xf32> to vector<1x16x128xf32>
    %113 = arith.mulf %112, %111 : vector<1x16x128xf32>
    %114 = arith.addf %104, %113 : vector<1x16x128xf32>
    %c11_i32 = arith.constant 11 : i32
    %115 = arith.addi %3, %c11_i32 : i32
    %c0_48 = arith.constant 0 : index
    %116 = arith.index_cast %115 : i32 to index
    %c0_49 = arith.constant 0 : index
    %117 = vector.load %arg2[%c0_48, %116, %c0_49] : memref<1x16x128xf32, #tpu.memory_space<vmem>>, vector<1x1x128xf32>
    %118 = arith.index_cast %c11_i32 : i32 to index
    %c0_50 = arith.constant 0 : index
    %c0_51 = arith.constant 0 : index
    %119 = vector.load %arg3[%118, %c0_50, %c0_51] : memref<16x16x128xf32, #tpu.memory_space<vmem>>, vector<1x16x128xf32>
    %120 = vector.shape_cast %119 : vector<1x16x128xf32> to vector<16x128xf32>
    %121 = vector.shape_cast %120 : vector<16x128xf32> to vector<1x16x128xf32>
    %122 = vector.broadcast %117 : vector<1x1x128xf32> to vector<1x16x128xf32>
    %123 = arith.mulf %122, %121 : vector<1x16x128xf32>
    %124 = arith.addf %114, %123 : vector<1x16x128xf32>
    %c12_i32 = arith.constant 12 : i32
    %125 = arith.addi %3, %c12_i32 : i32
    %c0_52 = arith.constant 0 : index
    %126 = arith.index_cast %125 : i32 to index
    %c0_53 = arith.constant 0 : index
    %127 = vector.load %arg2[%c0_52, %126, %c0_53] : memref<1x16x128xf32, #tpu.memory_space<vmem>>, vector<1x1x128xf32>
    %128 = arith.index_cast %c12_i32 : i32 to index
    %c0_54 = arith.constant 0 : index
    %c0_55 = arith.constant 0 : index
    %129 = vector.load %arg3[%128, %c0_54, %c0_55] : memref<16x16x128xf32, #tpu.memory_space<vmem>>, vector<1x16x128xf32>
    %130 = vector.shape_cast %129 : vector<1x16x128xf32> to vector<16x128xf32>
    %131 = vector.shape_cast %130 : vector<16x128xf32> to vector<1x16x128xf32>
    %132 = vector.broadcast %127 : vector<1x1x128xf32> to vector<1x16x128xf32>
    %133 = arith.mulf %132, %131 : vector<1x16x128xf32>
    %134 = arith.addf %124, %133 : vector<1x16x128xf32>
    %c13_i32 = arith.constant 13 : i32
    %135 = arith.addi %3, %c13_i32 : i32
    %c0_56 = arith.constant 0 : index
    %136 = arith.index_cast %135 : i32 to index
    %c0_57 = arith.constant 0 : index
    %137 = vector.load %arg2[%c0_56, %136, %c0_57] : memref<1x16x128xf32, #tpu.memory_space<vmem>>, vector<1x1x128xf32>
    %138 = arith.index_cast %c13_i32 : i32 to index
    %c0_58 = arith.constant 0 : index
    %c0_59 = arith.constant 0 : index
    %139 = vector.load %arg3[%138, %c0_58, %c0_59] : memref<16x16x128xf32, #tpu.memory_space<vmem>>, vector<1x16x128xf32>
    %140 = vector.shape_cast %139 : vector<1x16x128xf32> to vector<16x128xf32>
    %141 = vector.shape_cast %140 : vector<16x128xf32> to vector<1x16x128xf32>
    %142 = vector.broadcast %137 : vector<1x1x128xf32> to vector<1x16x128xf32>
    %143 = arith.mulf %142, %141 : vector<1x16x128xf32>
    %144 = arith.addf %134, %143 : vector<1x16x128xf32>
    %c14_i32 = arith.constant 14 : i32
    %145 = arith.addi %3, %c14_i32 : i32
    %c0_60 = arith.constant 0 : index
    %146 = arith.index_cast %145 : i32 to index
    %c0_61 = arith.constant 0 : index
    %147 = vector.load %arg2[%c0_60, %146, %c0_61] : memref<1x16x128xf32, #tpu.memory_space<vmem>>, vector<1x1x128xf32>
    %148 = arith.index_cast %c14_i32 : i32 to index
    %c0_62 = arith.constant 0 : index
    %c0_63 = arith.constant 0 : index
    %149 = vector.load %arg3[%148, %c0_62, %c0_63] : memref<16x16x128xf32, #tpu.memory_space<vmem>>, vector<1x16x128xf32>
    %150 = vector.shape_cast %149 : vector<1x16x128xf32> to vector<16x128xf32>
    %151 = vector.shape_cast %150 : vector<16x128xf32> to vector<1x16x128xf32>
    %152 = vector.broadcast %147 : vector<1x1x128xf32> to vector<1x16x128xf32>
    %153 = arith.mulf %152, %151 : vector<1x16x128xf32>
    %154 = arith.addf %144, %153 : vector<1x16x128xf32>
    %c15_i32 = arith.constant 15 : i32
    %155 = arith.addi %3, %c15_i32 : i32
    %c0_64 = arith.constant 0 : index
    %156 = arith.index_cast %155 : i32 to index
    %c0_65 = arith.constant 0 : index
    %157 = vector.load %arg2[%c0_64, %156, %c0_65] : memref<1x16x128xf32, #tpu.memory_space<vmem>>, vector<1x1x128xf32>
    %158 = arith.index_cast %c15_i32 : i32 to index
    %c0_66 = arith.constant 0 : index
    %c0_67 = arith.constant 0 : index
    %159 = vector.load %arg3[%158, %c0_66, %c0_67] : memref<16x16x128xf32, #tpu.memory_space<vmem>>, vector<1x16x128xf32>
    %160 = vector.shape_cast %159 : vector<1x16x128xf32> to vector<16x128xf32>
    %161 = vector.shape_cast %160 : vector<16x128xf32> to vector<1x16x128xf32>
    %162 = vector.broadcast %157 : vector<1x1x128xf32> to vector<1x16x128xf32>
    %163 = arith.mulf %162, %161 : vector<1x16x128xf32>
    %164 = arith.addf %154, %163 : vector<1x16x128xf32>
    %c16_i32_68 = arith.constant 16 : i32
    %c1_i32_69 = arith.constant 1 : i32
    %165 = arith.addi %arg1, %c1_i32_69 : i32
    %c1_i32_70 = arith.constant 1 : i32
    %166 = arith.cmpi slt, %165, %c1_i32_70 : i32
    %167 = arith.extui %166 : i1 to i32
    %c0_i32_71 = arith.constant 0 : i32
    %168 = arith.cmpi ne, %167, %c0_i32_71 : i32
    scf.if %168 {
      %c0_75 = arith.constant 0 : index
      %c0_76 = arith.constant 0 : index
      %c0_77 = arith.constant 0 : index
      %173 = vector.load %arg9[%c0_75, %c0_76, %c0_77] : memref<1x16x128xf32, #tpu.memory_space<vmem>>, vector<1x16x128xf32>
      tpu.vector_store %arg9[%c0_75, %c0_76, %c0_77], %164 {strides = array<i32>} : memref<1x16x128xf32, #tpu.memory_space<vmem>>, vector<1x16x128xf32>,
    } else {
    }
    %c1_i32_72 = arith.constant 1 : i32
    %169 = arith.addi %arg1, %c1_i32_72 : i32
    %c1_i32_73 = arith.constant 1 : i32
    %170 = arith.cmpi eq, %169, %c1_i32_73 : i32
    %171 = arith.extui %170 : i1 to i32
    %c0_i32_74 = arith.constant 0 : i32
    %172 = arith.cmpi ne, %171, %c0_i32_74 : i32
    scf.if %172 {
      %c0_75 = arith.constant 0 : index
      %c15 = arith.constant 15 : index
      %c0_76 = arith.constant 0 : index
      %173 = vector.load %arg2[%c0_75, %c15, %c0_76] : memref<1x16x128xf32, #tpu.memory_space<vmem>>, vector<1x1x128xf32>
      %c0_77 = arith.constant 0 : index
      %c0_78 = arith.constant 0 : index
      %174 = vector.load %arg4[%c0_77, %c0_78] : memref<16x128xf32, #tpu.memory_space<vmem>>, vector<16x128xf32>
      %175 = vector.shape_cast %174 : vector<16x128xf32> to vector<1x16x128xf32>
      %176 = arith.addf %164, %175 : vector<1x16x128xf32>
      %c0_79 = arith.constant 0 : index
      %c0_80 = arith.constant 0 : index
      %177 = vector.load %arg5[%c0_79, %c0_80] : memref<16x128xf32, #tpu.memory_space<vmem>>, vector<16x128xf32>
      %178 = vector.shape_cast %177 : vector<16x128xf32> to vector<1x16x128xf32>
      %179 = vector.broadcast %173 : vector<1x1x128xf32> to vector<1x16x128xf32>
      %180 = arith.mulf %179, %178 : vector<1x16x128xf32>
      %181 = arith.addf %176, %180 : vector<1x16x128xf32>
      %182 = vector.extract_strided_slice %181 {offsets = [0, 0, 0], sizes = [1, 8, 128], strides = [1, 1, 1]} : vector<1x16x128xf32> to vector<1x8x128xf32>
      %183 = vector.extract_strided_slice %181 {offsets = [0, 8, 0], sizes = [1, 8, 128], strides = [1, 1, 1]} : vector<1x16x128xf32> to vector<1x8x128xf32>
      %cst = arith.constant 2.000000e+00 : f32
      %184 = vector.broadcast %cst : f32 to vector<1x8x128xf32>
      %185 = arith.mulf %184, %183 : vector<1x8x128xf32>
      %186 = math.exp %185 : vector<1x8x128xf32>
      %c0_81 = arith.constant 0 : index
      %c0_82 = arith.constant 0 : index
      %187 = vector.load %arg7[%c0_81, %c0_82] : memref<128x128xf32, #tpu.memory_space<vmem>>, vector<128x128xf32>
      %188 = vector.shape_cast %182 : vector<1x8x128xf32> to vector<8x128xf32>
      %cst_83 = arith.constant dense<0.000000e+00> : vector<8x128xf32>
      %189 = tpu.matmul %188, %187, %cst_83 {dimension_numbers = #tpu.dot_dimension_numbers<[1], [0], [0], [1], [0, 0, 1, 1], [], []>} : vector<8x128xf32>, vector<128x128xf32>, vector<8x128xf32> -> vector<8x128xf32>
      %190 = vector.shape_cast %189 : vector<8x128xf32> to vector<1x8x128xf32>
      %191 = vector.shape_cast %186 : vector<1x8x128xf32> to vector<8x128xf32>
      %cst_84 = arith.constant dense<0.000000e+00> : vector<8x128xf32>
      %192 = tpu.matmul %191, %187, %cst_84 {dimension_numbers = #tpu.dot_dimension_numbers<[1], [0], [0], [1], [0, 0, 1, 1], [], []>} : vector<8x128xf32>, vector<128x128xf32>, vector<8x128xf32> -> vector<8x128xf32>
      %193 = vector.shape_cast %192 : vector<8x128xf32> to vector<1x8x128xf32>
      %c0_85 = arith.constant 0 : index
      %c0_86 = arith.constant 0 : index
      %194 = vector.load %arg6[%c0_85, %c0_86] : memref<1x128xf32, #tpu.memory_space<vmem>>, vector<1x128xf32>
      %195 = vector.shape_cast %194 : vector<1x128xf32> to vector<1x1x128xf32>
      %cst_87 = arith.constant 1.000000e+00 : f32
      %196 = vector.broadcast %cst_87 : f32 to vector<1x1x128xf32>
      %197 = arith.subf %196, %195 : vector<1x1x128xf32>
      %198 = vector.broadcast %195 : vector<1x1x128xf32> to vector<1x8x128xf32>
      %199 = arith.mulf %198, %182 : vector<1x8x128xf32>
      %200 = vector.broadcast %197 : vector<1x1x128xf32> to vector<1x8x128xf32>
      %201 = arith.mulf %200, %190 : vector<1x8x128xf32>
      %202 = arith.addf %199, %201 : vector<1x8x128xf32>
      %203 = arith.mulf %195, %195 : vector<1x1x128xf32>
      %204 = vector.broadcast %203 : vector<1x1x128xf32> to vector<1x8x128xf32>
      %205 = arith.mulf %204, %186 : vector<1x8x128xf32>
      %206 = arith.mulf %197, %197 : vector<1x1x128xf32>
      %207 = vector.broadcast %206 : vector<1x1x128xf32> to vector<1x8x128xf32>
      %208 = arith.mulf %207, %193 : vector<1x8x128xf32>
      %209 = arith.addf %205, %208 : vector<1x8x128xf32>
      %c0_88 = arith.constant 0 : index
      %c0_89 = arith.constant 0 : index
      %c0_90 = arith.constant 0 : index
      %210 = vector.load %arg8[%c0_88, %c0_89, %c0_90] : memref<1x16x128xf32, #tpu.memory_space<vmem>>, vector<1x8x128xf32>
      tpu.vector_store %arg8[%c0_88, %c0_89, %c0_90], %202 {strides = array<i32>} : memref<1x16x128xf32, #tpu.memory_space<vmem>>, vector<1x8x128xf32>,
      %211 = math.log %209 : vector<1x8x128xf32>
      %cst_91 = arith.constant 5.000000e-01 : f32
      %212 = vector.broadcast %cst_91 : f32 to vector<1x8x128xf32>
      %213 = arith.mulf %212, %211 : vector<1x8x128xf32>
      %c0_92 = arith.constant 0 : index
      %c8 = arith.constant 8 : index
      %c0_93 = arith.constant 0 : index
      %214 = vector.load %arg8[%c0_92, %c8, %c0_93] : memref<1x16x128xf32, #tpu.memory_space<vmem>>, vector<1x8x128xf32>
      tpu.vector_store %arg8[%c0_92, %c8, %c0_93], %213 {strides = array<i32>} : memref<1x16x128xf32, #tpu.memory_space<vmem>>, vector<1x8x128xf32>,
    } else {
    }
    return
  }
  func.func @transform_0(%arg0: i32, %arg1: i32) -> (i32, i32, i32) {
    %c0_i32 = arith.constant 0 : i32
    %c0_i32_0 = arith.constant 0 : i32
    %c0_i32_1 = arith.constant 0 : i32
    return %arg0, %c0_i32, %c0_i32_0 : i32, i32, i32
  }
  func.func @transform_1(%arg0: i32, %arg1: i32) -> (i32, i32, i32) {
    %c0_i32 = arith.constant 0 : i32
    %c0_i32_0 = arith.constant 0 : i32
    %c0_i32_1 = arith.constant 0 : i32
    return %arg1, %c0_i32, %c0_i32_0 : i32, i32, i32
  }
  func.func @transform_2(%arg0: i32, %arg1: i32) -> (i32, i32) {
    %c0_i32 = arith.constant 0 : i32
    %c0_i32_0 = arith.constant 0 : i32
    %c0_i32_1 = arith.constant 0 : i32
    return %c0_i32, %c0_i32_0 : i32, i32
  }
  func.func @transform_3(%arg0: i32, %arg1: i32) -> (i32, i32) {
    %c0_i32 = arith.constant 0 : i32
    %c0_i32_0 = arith.constant 0 : i32
    %c0_i32_1 = arith.constant 0 : i32
    return %c0_i32, %c0_i32_0 : i32, i32
  }
  func.func @transform_4(%arg0: i32, %arg1: i32) -> (i32, i32) {
    %c0_i32 = arith.constant 0 : i32
    %c0_i32_0 = arith.constant 0 : i32
    %c0_i32_1 = arith.constant 0 : i32
    return %c0_i32, %c0_i32_0 : i32, i32
  }
  func.func @transform_5(%arg0: i32, %arg1: i32) -> (i32, i32) {
    %c0_i32 = arith.constant 0 : i32
    %c0_i32_0 = arith.constant 0 : i32
    %c0_i32_1 = arith.constant 0 : i32
    return %c0_i32, %c0_i32_0 : i32, i32
  }
  func.func @transform_6(%arg0: i32, %arg1: i32) -> (i32, i32, i32) {
    %c0_i32 = arith.constant 0 : i32
    %c0_i32_0 = arith.constant 0 : i32
    %c0_i32_1 = arith.constant 0 : i32
    return %arg0, %c0_i32, %c0_i32_0 : i32, i32, i32
  }
}

module attributes {stable_mosaic.version = 11 : i64} {
  func.func @kernel(%arg0: i32, %arg1: i32, %arg2: memref<1x16x128xf32, #tpu.memory_space<vmem>>, %arg3: memref<16x16x128xf32, #tpu.memory_space<vmem>>, %arg4: memref<16x128xf32, #tpu.memory_space<vmem>>, %arg5: memref<16x128xf32, #tpu.memory_space<vmem>>, %arg6: memref<1x128xf32, #tpu.memory_space<vmem>>, %arg7: memref<128x128xf32, #tpu.memory_space<vmem>>, %arg8: memref<1x16x128xf32, #tpu.memory_space<vmem>>, %arg9: memref<1x16x128xf32, #tpu.memory_space<vmem>>) attributes {dimension_semantics = [#tpu.dimension_semantics<parallel>, #tpu.dimension_semantics<arbitrary>], iteration_bounds = array<i64: 2, 1>, scalar_prefetch = 0 : i64, scratch_operands = 1 : i64, tpu.core_type = #tpu.core_type<tc>, window_params = [{transform_indices = @transform_0, window_bounds = array<i64: 1, 16, 128>}, {transform_indices = @transform_1, window_bounds = array<i64: 16, 16, 128>}, {pipeline_mode = #tpu.pipeline_mode<synchronous>, transform_indices = @transform_2, window_bounds = array<i64: 16, 128>}, {pipeline_mode = #tpu.pipeline_mode<synchronous>, transform_indices = @transform_3, window_bounds = array<i64: 16, 128>}, {pipeline_mode = #tpu.pipeline_mode<synchronous>, transform_indices = @transform_4, window_bounds = array<i64: 1, 128>}, {pipeline_mode = #tpu.pipeline_mode<synchronous>, transform_indices = @transform_5, window_bounds = array<i64: 128, 128>}, {transform_indices = @transform_6, window_bounds = array<i64: 1, 16, 128>}]} {
    %c0_i32 = arith.constant 0 : i32
    %0 = arith.cmpi eq, %arg1, %c0_i32 : i32
    %1 = arith.extui %0 : i1 to i32
    %c0_i32_0 = arith.constant 0 : i32
    %2 = arith.cmpi ne, %1, %c0_i32_0 : i32
    scf.if %2 {
      %cst = arith.constant 0.000000e+00 : f32
      %173 = vector.broadcast %cst : f32 to vector<1x16x128xf32>
      %c0_75 = arith.constant 0 : index
      %c0_76 = arith.constant 0 : index
      %c0_77 = arith.constant 0 : index
      %174 = vector.load %arg9[%c0_75, %c0_76, %c0_77] : memref<1x16x128xf32, #tpu.memory_space<vmem>>, vector<1x16x128xf32>
      tpu.vector_store %arg9[%c0_75, %c0_76, %c0_77], %173 {strides = array<i32>} : memref<1x16x128xf32, #tpu.memory_space<vmem>>, vector<1x16x128xf32>,
    } else {
    }
    %c16_i32 = arith.constant 16 : i32
    %3 = arith.muli %arg1, %c16_i32 : i32
    %c0 = arith.constant 0 : index
    %c0_1 = arith.constant 0 : index
    %c0_2 = arith.constant 0 : index
    %4 = vector.load %arg9[%c0, %c0_1, %c0_2] : memref<1x16x128xf32, #tpu.memory_space<vmem>>, vector<1x16x128xf32>
    %c0_i32_3 = arith.constant 0 : i32
    %5 = arith.addi %3, %c0_i32_3 : i32
    %c0_4 = arith.constant 0 : index
    %6 = arith.index_cast %5 : i32 to index
    %c0_5 = arith.constant 0 : index
    %7 = vector.load %arg2[%c0_4, %6, %c0_5] : memref<1x16x128xf32, #tpu.memory_space<vmem>>, vector<1x1x128xf32>
    %8 = arith.index_cast %c0_i32_3 : i32 to index
    %c0_6 = arith.constant 0 : index
    %c0_7 = arith.constant 0 : index
    %9 = vector.load %arg3[%8, %c0_6, %c0_7] : memref<16x16x128xf32, #tpu.memory_space<vmem>>, vector<1x16x128xf32>
    %10 = vector.shape_cast %9 : vector<1x16x128xf32> to vector<16x128xf32>
    %11 = vector.shape_cast %10 : vector<16x128xf32> to vector<1x16x128xf32>
    %12 = vector.broadcast %7 : vector<1x1x128xf32> to vector<1x16x128xf32>
    %13 = arith.mulf %12, %11 : vector<1x16x128xf32>
    %14 = arith.addf %4, %13 : vector<1x16x128xf32>
    %c1_i32 = arith.constant 1 : i32
    %15 = arith.addi %3, %c1_i32 : i32
    %c0_8 = arith.constant 0 : index
    %16 = arith.index_cast %15 : i32 to index
    %c0_9 = arith.constant 0 : index
    %17 = vector.load %arg2[%c0_8, %16, %c0_9] : memref<1x16x128xf32, #tpu.memory_space<vmem>>, vector<1x1x128xf32>
    %18 = arith.index_cast %c1_i32 : i32 to index
    %c0_10 = arith.constant 0 : index
    %c0_11 = arith.constant 0 : index
    %19 = vector.load %arg3[%18, %c0_10, %c0_11] : memref<16x16x128xf32, #tpu.memory_space<vmem>>, vector<1x16x128xf32>
    %20 = vector.shape_cast %19 : vector<1x16x128xf32> to vector<16x128xf32>
    %21 = vector.shape_cast %20 : vector<16x128xf32> to vector<1x16x128xf32>
    %22 = vector.broadcast %17 : vector<1x1x128xf32> to vector<1x16x128xf32>
    %23 = arith.mulf %22, %21 : vector<1x16x128xf32>
    %24 = arith.addf %14, %23 : vector<1x16x128xf32>
    %c2_i32 = arith.constant 2 : i32
    %25 = arith.addi %3, %c2_i32 : i32
    %c0_12 = arith.constant 0 : index
    %26 = arith.index_cast %25 : i32 to index
    %c0_13 = arith.constant 0 : index
    %27 = vector.load %arg2[%c0_12, %26, %c0_13] : memref<1x16x128xf32, #tpu.memory_space<vmem>>, vector<1x1x128xf32>
    %28 = arith.index_cast %c2_i32 : i32 to index
    %c0_14 = arith.constant 0 : index
    %c0_15 = arith.constant 0 : index
    %29 = vector.load %arg3[%28, %c0_14, %c0_15] : memref<16x16x128xf32, #tpu.memory_space<vmem>>, vector<1x16x128xf32>
    %30 = vector.shape_cast %29 : vector<1x16x128xf32> to vector<16x128xf32>
    %31 = vector.shape_cast %30 : vector<16x128xf32> to vector<1x16x128xf32>
    %32 = vector.broadcast %27 : vector<1x1x128xf32> to vector<1x16x128xf32>
    %33 = arith.mulf %32, %31 : vector<1x16x128xf32>
    %34 = arith.addf %24, %33 : vector<1x16x128xf32>
    %c3_i32 = arith.constant 3 : i32
    %35 = arith.addi %3, %c3_i32 : i32
    %c0_16 = arith.constant 0 : index
    %36 = arith.index_cast %35 : i32 to index
    %c0_17 = arith.constant 0 : index
    %37 = vector.load %arg2[%c0_16, %36, %c0_17] : memref<1x16x128xf32, #tpu.memory_space<vmem>>, vector<1x1x128xf32>
    %38 = arith.index_cast %c3_i32 : i32 to index
    %c0_18 = arith.constant 0 : index
    %c0_19 = arith.constant 0 : index
    %39 = vector.load %arg3[%38, %c0_18, %c0_19] : memref<16x16x128xf32, #tpu.memory_space<vmem>>, vector<1x16x128xf32>
    %40 = vector.shape_cast %39 : vector<1x16x128xf32> to vector<16x128xf32>
    %41 = vector.shape_cast %40 : vector<16x128xf32> to vector<1x16x128xf32>
    %42 = vector.broadcast %37 : vector<1x1x128xf32> to vector<1x16x128xf32>
    %43 = arith.mulf %42, %41 : vector<1x16x128xf32>
    %44 = arith.addf %34, %43 : vector<1x16x128xf32>
    %c4_i32 = arith.constant 4 : i32
    %45 = arith.addi %3, %c4_i32 : i32
    %c0_20 = arith.constant 0 : index
    %46 = arith.index_cast %45 : i32 to index
    %c0_21 = arith.constant 0 : index
    %47 = vector.load %arg2[%c0_20, %46, %c0_21] : memref<1x16x128xf32, #tpu.memory_space<vmem>>, vector<1x1x128xf32>
    %48 = arith.index_cast %c4_i32 : i32 to index
    %c0_22 = arith.constant 0 : index
    %c0_23 = arith.constant 0 : index
    %49 = vector.load %arg3[%48, %c0_22, %c0_23] : memref<16x16x128xf32, #tpu.memory_space<vmem>>, vector<1x16x128xf32>
    %50 = vector.shape_cast %49 : vector<1x16x128xf32> to vector<16x128xf32>
    %51 = vector.shape_cast %50 : vector<16x128xf32> to vector<1x16x128xf32>
    %52 = vector.broadcast %47 : vector<1x1x128xf32> to vector<1x16x128xf32>
    %53 = arith.mulf %52, %51 : vector<1x16x128xf32>
    %54 = arith.addf %44, %53 : vector<1x16x128xf32>
    %c5_i32 = arith.constant 5 : i32
    %55 = arith.addi %3, %c5_i32 : i32
    %c0_24 = arith.constant 0 : index
    %56 = arith.index_cast %55 : i32 to index
    %c0_25 = arith.constant 0 : index
    %57 = vector.load %arg2[%c0_24, %56, %c0_25] : memref<1x16x128xf32, #tpu.memory_space<vmem>>, vector<1x1x128xf32>
    %58 = arith.index_cast %c5_i32 : i32 to index
    %c0_26 = arith.constant 0 : index
    %c0_27 = arith.constant 0 : index
    %59 = vector.load %arg3[%58, %c0_26, %c0_27] : memref<16x16x128xf32, #tpu.memory_space<vmem>>, vector<1x16x128xf32>
    %60 = vector.shape_cast %59 : vector<1x16x128xf32> to vector<16x128xf32>
    %61 = vector.shape_cast %60 : vector<16x128xf32> to vector<1x16x128xf32>
    %62 = vector.broadcast %57 : vector<1x1x128xf32> to vector<1x16x128xf32>
    %63 = arith.mulf %62, %61 : vector<1x16x128xf32>
    %64 = arith.addf %54, %63 : vector<1x16x128xf32>
    %c6_i32 = arith.constant 6 : i32
    %65 = arith.addi %3, %c6_i32 : i32
    %c0_28 = arith.constant 0 : index
    %66 = arith.index_cast %65 : i32 to index
    %c0_29 = arith.constant 0 : index
    %67 = vector.load %arg2[%c0_28, %66, %c0_29] : memref<1x16x128xf32, #tpu.memory_space<vmem>>, vector<1x1x128xf32>
    %68 = arith.index_cast %c6_i32 : i32 to index
    %c0_30 = arith.constant 0 : index
    %c0_31 = arith.constant 0 : index
    %69 = vector.load %arg3[%68, %c0_30, %c0_31] : memref<16x16x128xf32, #tpu.memory_space<vmem>>, vector<1x16x128xf32>
    %70 = vector.shape_cast %69 : vector<1x16x128xf32> to vector<16x128xf32>
    %71 = vector.shape_cast %70 : vector<16x128xf32> to vector<1x16x128xf32>
    %72 = vector.broadcast %67 : vector<1x1x128xf32> to vector<1x16x128xf32>
    %73 = arith.mulf %72, %71 : vector<1x16x128xf32>
    %74 = arith.addf %64, %73 : vector<1x16x128xf32>
    %c7_i32 = arith.constant 7 : i32
    %75 = arith.addi %3, %c7_i32 : i32
    %c0_32 = arith.constant 0 : index
    %76 = arith.index_cast %75 : i32 to index
    %c0_33 = arith.constant 0 : index
    %77 = vector.load %arg2[%c0_32, %76, %c0_33] : memref<1x16x128xf32, #tpu.memory_space<vmem>>, vector<1x1x128xf32>
    %78 = arith.index_cast %c7_i32 : i32 to index
    %c0_34 = arith.constant 0 : index
    %c0_35 = arith.constant 0 : index
    %79 = vector.load %arg3[%78, %c0_34, %c0_35] : memref<16x16x128xf32, #tpu.memory_space<vmem>>, vector<1x16x128xf32>
    %80 = vector.shape_cast %79 : vector<1x16x128xf32> to vector<16x128xf32>
    %81 = vector.shape_cast %80 : vector<16x128xf32> to vector<1x16x128xf32>
    %82 = vector.broadcast %77 : vector<1x1x128xf32> to vector<1x16x128xf32>
    %83 = arith.mulf %82, %81 : vector<1x16x128xf32>
    %84 = arith.addf %74, %83 : vector<1x16x128xf32>
    %c8_i32 = arith.constant 8 : i32
    %85 = arith.addi %3, %c8_i32 : i32
    %c0_36 = arith.constant 0 : index
    %86 = arith.index_cast %85 : i32 to index
    %c0_37 = arith.constant 0 : index
    %87 = vector.load %arg2[%c0_36, %86, %c0_37] : memref<1x16x128xf32, #tpu.memory_space<vmem>>, vector<1x1x128xf32>
    %88 = arith.index_cast %c8_i32 : i32 to index
    %c0_38 = arith.constant 0 : index
    %c0_39 = arith.constant 0 : index
    %89 = vector.load %arg3[%88, %c0_38, %c0_39] : memref<16x16x128xf32, #tpu.memory_space<vmem>>, vector<1x16x128xf32>
    %90 = vector.shape_cast %89 : vector<1x16x128xf32> to vector<16x128xf32>
    %91 = vector.shape_cast %90 : vector<16x128xf32> to vector<1x16x128xf32>
    %92 = vector.broadcast %87 : vector<1x1x128xf32> to vector<1x16x128xf32>
    %93 = arith.mulf %92, %91 : vector<1x16x128xf32>
    %94 = arith.addf %84, %93 : vector<1x16x128xf32>
    %c9_i32 = arith.constant 9 : i32
    %95 = arith.addi %3, %c9_i32 : i32
    %c0_40 = arith.constant 0 : index
    %96 = arith.index_cast %95 : i32 to index
    %c0_41 = arith.constant 0 : index
    %97 = vector.load %arg2[%c0_40, %96, %c0_41] : memref<1x16x128xf32, #tpu.memory_space<vmem>>, vector<1x1x128xf32>
    %98 = arith.index_cast %c9_i32 : i32 to index
    %c0_42 = arith.constant 0 : index
    %c0_43 = arith.constant 0 : index
    %99 = vector.load %arg3[%98, %c0_42, %c0_43] : memref<16x16x128xf32, #tpu.memory_space<vmem>>, vector<1x16x128xf32>
    %100 = vector.shape_cast %99 : vector<1x16x128xf32> to vector<16x128xf32>
    %101 = vector.shape_cast %100 : vector<16x128xf32> to vector<1x16x128xf32>
    %102 = vector.broadcast %97 : vector<1x1x128xf32> to vector<1x16x128xf32>
    %103 = arith.mulf %102, %101 : vector<1x16x128xf32>
    %104 = arith.addf %94, %103 : vector<1x16x128xf32>
    %c10_i32 = arith.constant 10 : i32
    %105 = arith.addi %3, %c10_i32 : i32
    %c0_44 = arith.constant 0 : index
    %106 = arith.index_cast %105 : i32 to index
    %c0_45 = arith.constant 0 : index
    %107 = vector.load %arg2[%c0_44, %106, %c0_45] : memref<1x16x128xf32, #tpu.memory_space<vmem>>, vector<1x1x128xf32>
    %108 = arith.index_cast %c10_i32 : i32 to index
    %c0_46 = arith.constant 0 : index
    %c0_47 = arith.constant 0 : index
    %109 = vector.load %arg3[%108, %c0_46, %c0_47] : memref<16x16x128xf32, #tpu.memory_space<vmem>>, vector<1x16x128xf32>
    %110 = vector.shape_cast %109 : vector<1x16x128xf32> to vector<16x128xf32>
    %111 = vector.shape_cast %110 : vector<16x128xf32> to vector<1x16x128xf32>
    %112 = vector.broadcast %107 : vector<1x1x128xf32> to vector<1x16x128xf32>
    %113 = arith.mulf %112, %111 : vector<1x16x128xf32>
    %114 = arith.addf %104, %113 : vector<1x16x128xf32>
    %c11_i32 = arith.constant 11 : i32
    %115 = arith.addi %3, %c11_i32 : i32
    %c0_48 = arith.constant 0 : index
    %116 = arith.index_cast %115 : i32 to index
    %c0_49 = arith.constant 0 : index
    %117 = vector.load %arg2[%c0_48, %116, %c0_49] : memref<1x16x128xf32, #tpu.memory_space<vmem>>, vector<1x1x128xf32>
    %118 = arith.index_cast %c11_i32 : i32 to index
    %c0_50 = arith.constant 0 : index
    %c0_51 = arith.constant 0 : index
    %119 = vector.load %arg3[%118, %c0_50, %c0_51] : memref<16x16x128xf32, #tpu.memory_space<vmem>>, vector<1x16x128xf32>
    %120 = vector.shape_cast %119 : vector<1x16x128xf32> to vector<16x128xf32>
    %121 = vector.shape_cast %120 : vector<16x128xf32> to vector<1x16x128xf32>
    %122 = vector.broadcast %117 : vector<1x1x128xf32> to vector<1x16x128xf32>
    %123 = arith.mulf %122, %121 : vector<1x16x128xf32>
    %124 = arith.addf %114, %123 : vector<1x16x128xf32>
    %c12_i32 = arith.constant 12 : i32
    %125 = arith.addi %3, %c12_i32 : i32
    %c0_52 = arith.constant 0 : index
    %126 = arith.index_cast %125 : i32 to index
    %c0_53 = arith.constant 0 : index
    %127 = vector.load %arg2[%c0_52, %126, %c0_53] : memref<1x16x128xf32, #tpu.memory_space<vmem>>, vector<1x1x128xf32>
    %128 = arith.index_cast %c12_i32 : i32 to index
    %c0_54 = arith.constant 0 : index
    %c0_55 = arith.constant 0 : index
    %129 = vector.load %arg3[%128, %c0_54, %c0_55] : memref<16x16x128xf32, #tpu.memory_space<vmem>>, vector<1x16x128xf32>
    %130 = vector.shape_cast %129 : vector<1x16x128xf32> to vector<16x128xf32>
    %131 = vector.shape_cast %130 : vector<16x128xf32> to vector<1x16x128xf32>
    %132 = vector.broadcast %127 : vector<1x1x128xf32> to vector<1x16x128xf32>
    %133 = arith.mulf %132, %131 : vector<1x16x128xf32>
    %134 = arith.addf %124, %133 : vector<1x16x128xf32>
    %c13_i32 = arith.constant 13 : i32
    %135 = arith.addi %3, %c13_i32 : i32
    %c0_56 = arith.constant 0 : index
    %136 = arith.index_cast %135 : i32 to index
    %c0_57 = arith.constant 0 : index
    %137 = vector.load %arg2[%c0_56, %136, %c0_57] : memref<1x16x128xf32, #tpu.memory_space<vmem>>, vector<1x1x128xf32>
    %138 = arith.index_cast %c13_i32 : i32 to index
    %c0_58 = arith.constant 0 : index
    %c0_59 = arith.constant 0 : index
    %139 = vector.load %arg3[%138, %c0_58, %c0_59] : memref<16x16x128xf32, #tpu.memory_space<vmem>>, vector<1x16x128xf32>
    %140 = vector.shape_cast %139 : vector<1x16x128xf32> to vector<16x128xf32>
    %141 = vector.shape_cast %140 : vector<16x128xf32> to vector<1x16x128xf32>
    %142 = vector.broadcast %137 : vector<1x1x128xf32> to vector<1x16x128xf32>
    %143 = arith.mulf %142, %141 : vector<1x16x128xf32>
    %144 = arith.addf %134, %143 : vector<1x16x128xf32>
    %c14_i32 = arith.constant 14 : i32
    %145 = arith.addi %3, %c14_i32 : i32
    %c0_60 = arith.constant 0 : index
    %146 = arith.index_cast %145 : i32 to index
    %c0_61 = arith.constant 0 : index
    %147 = vector.load %arg2[%c0_60, %146, %c0_61] : memref<1x16x128xf32, #tpu.memory_space<vmem>>, vector<1x1x128xf32>
    %148 = arith.index_cast %c14_i32 : i32 to index
    %c0_62 = arith.constant 0 : index
    %c0_63 = arith.constant 0 : index
    %149 = vector.load %arg3[%148, %c0_62, %c0_63] : memref<16x16x128xf32, #tpu.memory_space<vmem>>, vector<1x16x128xf32>
    %150 = vector.shape_cast %149 : vector<1x16x128xf32> to vector<16x128xf32>
    %151 = vector.shape_cast %150 : vector<16x128xf32> to vector<1x16x128xf32>
    %152 = vector.broadcast %147 : vector<1x1x128xf32> to vector<1x16x128xf32>
    %153 = arith.mulf %152, %151 : vector<1x16x128xf32>
    %154 = arith.addf %144, %153 : vector<1x16x128xf32>
    %c15_i32 = arith.constant 15 : i32
    %155 = arith.addi %3, %c15_i32 : i32
    %c0_64 = arith.constant 0 : index
    %156 = arith.index_cast %155 : i32 to index
    %c0_65 = arith.constant 0 : index
    %157 = vector.load %arg2[%c0_64, %156, %c0_65] : memref<1x16x128xf32, #tpu.memory_space<vmem>>, vector<1x1x128xf32>
    %158 = arith.index_cast %c15_i32 : i32 to index
    %c0_66 = arith.constant 0 : index
    %c0_67 = arith.constant 0 : index
    %159 = vector.load %arg3[%158, %c0_66, %c0_67] : memref<16x16x128xf32, #tpu.memory_space<vmem>>, vector<1x16x128xf32>
    %160 = vector.shape_cast %159 : vector<1x16x128xf32> to vector<16x128xf32>
    %161 = vector.shape_cast %160 : vector<16x128xf32> to vector<1x16x128xf32>
    %162 = vector.broadcast %157 : vector<1x1x128xf32> to vector<1x16x128xf32>
    %163 = arith.mulf %162, %161 : vector<1x16x128xf32>
    %164 = arith.addf %154, %163 : vector<1x16x128xf32>
    %c16_i32_68 = arith.constant 16 : i32
    %c1_i32_69 = arith.constant 1 : i32
    %165 = arith.addi %arg1, %c1_i32_69 : i32
    %c1_i32_70 = arith.constant 1 : i32
    %166 = arith.cmpi slt, %165, %c1_i32_70 : i32
    %167 = arith.extui %166 : i1 to i32
    %c0_i32_71 = arith.constant 0 : i32
    %168 = arith.cmpi ne, %167, %c0_i32_71 : i32
    scf.if %168 {
      %c0_75 = arith.constant 0 : index
      %c0_76 = arith.constant 0 : index
      %c0_77 = arith.constant 0 : index
      %173 = vector.load %arg9[%c0_75, %c0_76, %c0_77] : memref<1x16x128xf32, #tpu.memory_space<vmem>>, vector<1x16x128xf32>
      tpu.vector_store %arg9[%c0_75, %c0_76, %c0_77], %164 {strides = array<i32>} : memref<1x16x128xf32, #tpu.memory_space<vmem>>, vector<1x16x128xf32>,
    } else {
    }
    %c1_i32_72 = arith.constant 1 : i32
    %169 = arith.addi %arg1, %c1_i32_72 : i32
    %c1_i32_73 = arith.constant 1 : i32
    %170 = arith.cmpi eq, %169, %c1_i32_73 : i32
    %171 = arith.extui %170 : i1 to i32
    %c0_i32_74 = arith.constant 0 : i32
    %172 = arith.cmpi ne, %171, %c0_i32_74 : i32
    scf.if %172 {
      %c0_75 = arith.constant 0 : index
      %c15 = arith.constant 15 : index
      %c0_76 = arith.constant 0 : index
      %173 = vector.load %arg2[%c0_75, %c15, %c0_76] : memref<1x16x128xf32, #tpu.memory_space<vmem>>, vector<1x1x128xf32>
      %c0_77 = arith.constant 0 : index
      %c0_78 = arith.constant 0 : index
      %174 = vector.load %arg4[%c0_77, %c0_78] : memref<16x128xf32, #tpu.memory_space<vmem>>, vector<16x128xf32>
      %175 = vector.shape_cast %174 : vector<16x128xf32> to vector<1x16x128xf32>
      %176 = arith.addf %164, %175 : vector<1x16x128xf32>
      %c0_79 = arith.constant 0 : index
      %c0_80 = arith.constant 0 : index
      %177 = vector.load %arg5[%c0_79, %c0_80] : memref<16x128xf32, #tpu.memory_space<vmem>>, vector<16x128xf32>
      %178 = vector.shape_cast %177 : vector<16x128xf32> to vector<1x16x128xf32>
      %179 = vector.broadcast %173 : vector<1x1x128xf32> to vector<1x16x128xf32>
      %180 = arith.mulf %179, %178 : vector<1x16x128xf32>
      %181 = arith.addf %176, %180 : vector<1x16x128xf32>
      %182 = vector.extract_strided_slice %181 {offsets = [0, 0, 0], sizes = [1, 8, 128], strides = [1, 1, 1]} : vector<1x16x128xf32> to vector<1x8x128xf32>
      %183 = vector.extract_strided_slice %181 {offsets = [0, 8, 0], sizes = [1, 8, 128], strides = [1, 1, 1]} : vector<1x16x128xf32> to vector<1x8x128xf32>
      %cst = arith.constant 2.000000e+00 : f32
      %184 = vector.broadcast %cst : f32 to vector<1x8x128xf32>
      %185 = arith.mulf %184, %183 : vector<1x8x128xf32>
      %186 = math.exp %185 : vector<1x8x128xf32>
      %c0_81 = arith.constant 0 : index
      %c0_82 = arith.constant 0 : index
      %187 = vector.load %arg7[%c0_81, %c0_82] : memref<128x128xf32, #tpu.memory_space<vmem>>, vector<128x128xf32>
      %188 = vector.shape_cast %182 : vector<1x8x128xf32> to vector<8x128xf32>
      %cst_83 = arith.constant dense<0.000000e+00> : vector<8x128xf32>
      %189 = tpu.matmul %188, %187, %cst_83 {dimension_numbers = #tpu.dot_dimension_numbers<[1], [0], [0], [1], [0, 0, 1, 1], [], []>} : vector<8x128xf32>, vector<128x128xf32>, vector<8x128xf32> -> vector<8x128xf32>
      %190 = vector.shape_cast %189 : vector<8x128xf32> to vector<1x8x128xf32>
      %191 = vector.shape_cast %186 : vector<1x8x128xf32> to vector<8x128xf32>
      %cst_84 = arith.constant dense<0.000000e+00> : vector<8x128xf32>
      %192 = tpu.matmul %191, %187, %cst_84 {dimension_numbers = #tpu.dot_dimension_numbers<[1], [0], [0], [1], [0, 0, 1, 1], [], []>} : vector<8x128xf32>, vector<128x128xf32>, vector<8x128xf32> -> vector<8x128xf32>
      %193 = vector.shape_cast %192 : vector<8x128xf32> to vector<1x8x128xf32>
      %c0_85 = arith.constant 0 : index
      %c0_86 = arith.constant 0 : index
      %194 = vector.load %arg6[%c0_85, %c0_86] : memref<1x128xf32, #tpu.memory_space<vmem>>, vector<1x128xf32>
      %195 = vector.shape_cast %194 : vector<1x128xf32> to vector<1x1x128xf32>
      %cst_87 = arith.constant 1.000000e+00 : f32
      %196 = vector.broadcast %cst_87 : f32 to vector<1x1x128xf32>
      %197 = arith.subf %196, %195 : vector<1x1x128xf32>
      %198 = vector.broadcast %195 : vector<1x1x128xf32> to vector<1x8x128xf32>
      %199 = arith.mulf %198, %182 : vector<1x8x128xf32>
      %200 = vector.broadcast %197 : vector<1x1x128xf32> to vector<1x8x128xf32>
      %201 = arith.mulf %200, %190 : vector<1x8x128xf32>
      %202 = arith.addf %199, %201 : vector<1x8x128xf32>
      %203 = arith.mulf %195, %195 : vector<1x1x128xf32>
      %204 = vector.broadcast %203 : vector<1x1x128xf32> to vector<1x8x128xf32>
      %205 = arith.mulf %204, %186 : vector<1x8x128xf32>
      %206 = arith.mulf %197, %197 : vector<1x1x128xf32>
      %207 = vector.broadcast %206 : vector<1x1x128xf32> to vector<1x8x128xf32>
      %208 = arith.mulf %207, %193 : vector<1x8x128xf32>
      %209 = arith.addf %205, %208 : vector<1x8x128xf32>
      %c0_88 = arith.constant 0 : index
      %c0_89 = arith.constant 0 : index
      %c0_90 = arith.constant 0 : index
      %210 = vector.load %arg8[%c0_88, %c0_89, %c0_90] : memref<1x16x128xf32, #tpu.memory_space<vmem>>, vector<1x8x128xf32>
      tpu.vector_store %arg8[%c0_88, %c0_89, %c0_90], %202 {strides = array<i32>} : memref<1x16x128xf32, #tpu.memory_space<vmem>>, vector<1x8x128xf32>,
      %211 = math.log %209 : vector<1x8x128xf32>
      %cst_91 = arith.constant 5.000000e-01 : f32
      %212 = vector.broadcast %cst_91 : f32 to vector<1x8x128xf32>
      %213 = arith.mulf %212, %211 : vector<1x8x128xf32>
      %c0_92 = arith.constant 0 : index
      %c8 = arith.constant 8 : index
      %c0_93 = arith.constant 0 : index
      %214 = vector.load %arg8[%c0_92, %c8, %c0_93] : memref<1x16x128xf32, #tpu.memory_space<vmem>>, vector<1x8x128xf32>
      tpu.vector_store %arg8[%c0_92, %c8, %c0_93], %213 {strides = array<i32>} : memref<1x16x128xf32, #tpu.memory_space<vmem>>, vector<1x8x128xf32>,
    } else {
    }
    return
  }
  func.func @transform_0(%arg0: i32, %arg1: i32) -> (i32, i32, i32) {
    %c0_i32 = arith.constant 0 : i32
    %c0_i32_0 = arith.constant 0 : i32
    %c0_i32_1 = arith.constant 0 : i32
    return %arg0, %c0_i32, %c0_i32_0 : i32, i32, i32
  }
  func.func @transform_1(%arg0: i32, %arg1: i32) -> (i32, i32, i32) {
    %c0_i32 = arith.constant 0 : i32
    %c0_i32_0 = arith.constant 0 : i32
    %c0_i32_1 = arith.constant 0 : i32
    return %arg1, %c0_i32, %c0_i32_0 : i32, i32, i32
  }
  func.func @transform_2(%arg0: i32, %arg1: i32) -> (i32, i32) {
    %c0_i32 = arith.constant 0 : i32
    %c0_i32_0 = arith.constant 0 : i32
    %c0_i32_1 = arith.constant 0 : i32
    return %c0_i32, %c0_i32_0 : i32, i32
  }
  func.func @transform_3(%arg0: i32, %arg1: i32) -> (i32, i32) {
    %c0_i32 = arith.constant 0 : i32
    %c0_i32_0 = arith.constant 0 : i32
    %c0_i32_1 = arith.constant 0 : i32
    return %c0_i32, %c0_i32_0 : i32, i32
  }
  func.func @transform_4(%arg0: i32, %arg1: i32) -> (i32, i32) {
    %c0_i32 = arith.constant 0 : i32
    %c0_i32_0 = arith.constant 0 : i32
    %c0_i32_1 = arith.constant 0 : i32
    return %c0_i32, %c0_i32_0 : i32, i32
  }
  func.func @transform_5(%arg0: i32, %arg1: i32) -> (i32, i32) {
    %c0_i32 = arith.constant 0 : i32
    %c0_i32_0 = arith.constant 0 : i32
    %c0_i32_1 = arith.constant 0 : i32
    return %c0_i32, %c0_i32_0 : i32, i32
  }
  func.func @transform_6(%arg0: i32, %arg1: i32) -> (i32, i32, i32) {
    %c0_i32 = arith.constant 0 : i32
    %c0_i32_0 = arith.constant 0 : i32
    %c0_i32_1 = arith.constant 0 : i32
    return %arg0, %c0_i32, %c0_i32_0 : i32, i32, i32
  }
}

</mosaic_0001>

<llo_original>
// kernel: tpu_custom_call.1
$region0: #{tpu_custom_call.1}
  #allocation0 [shape = 'u32[]', space=smem, size = 0x4, offset = 0x4, fixed_abs, tag = 'smem constant byte address 0x4 - core index']
  #allocation1 [shape = 'u32[144,128]{1,0:T(1,128)}', space=vmem, size = 0x12000, scoped, tag = 'internal scratch']
  #allocation2 [shape = 'f32[1,16,128]{2,1,0:T(8,128)}', space=vmem, size = 0x2000, scoped, tag = 'scratch operand']
  %s0 = inlined_call_operand.hbm [shape: f32[2,16,128], index: 0, kind: input, shape index: {}]
  %s1 = inlined_call_operand.hbm [shape: f32[16,16,128], index: 1, kind: input, shape index: {}]
  %s2 = inlined_call_operand.hbm [shape: f32[16,128], index: 2, kind: input, shape index: {}]
  %s3 = inlined_call_operand.hbm [shape: f32[16,128], index: 3, kind: input, shape index: {}]
  %s4 = inlined_call_operand.vmem [shape: f32[1,128], index: 4, kind: input, shape index: {}]
  %s5 = inlined_call_operand.hbm [shape: f32[128,128], index: 5, kind: input, shape index: {}]
  %s6 = inlined_call_operand.hbm [shape: f32[2,16,128], index: 6, kind: output, shape index: {}]
  %s7 = sld [smem:[#allocation0]]
  $region89: #{tpu_custom_call.1} parent=0
    _
  %s9 = ssub.s32 1, %s7
  %s10 = scalar_select 0, %s9, %s7
  $region1: #{tpu_custom_call.1} parent=0
    #allocation3 [shape = 'u8[16384]{0}', space=vmem, size = 0x4000, scoped, tag = 'input window, operand 0']
    #allocation4 [shape = 's32[2]{0}', space=sflag, size = 0x8, scoped, tag = 'scoped memory for tpu_custom_call.1']
    #allocation5 [shape = 's32[2]{0}', space=sflag, size = 0x8, scoped, tag = 'scoped memory for tpu_custom_call.1']
    #allocation6 [shape = 'u8[131072]{0}', space=vmem, size = 0x20000, scoped, tag = 'input window, operand 1, single buffered']
    #allocation7 [shape = 's32[1]{0}', space=sflag, size = 0x4, scoped, tag = 'scoped memory for tpu_custom_call.1']
    #allocation8 [shape = 'u8[8192]{0}', space=vmem, size = 0x2000, scoped, tag = 'input window, operand 2, single buffered']
    #allocation9 [shape = 'u8[8192]{0}', space=vmem, size = 0x2000, scoped, tag = 'input window, operand 3, single buffered']
    #allocation10 [shape = 's32[1]{0}', space=sflag, size = 0x4, scoped, tag = 'scoped memory for tpu_custom_call.1']
    #allocation11 [shape = 'u8[65536]{0}', space=vmem, size = 0x10000, scoped, tag = 'input window, operand 5, single buffered']
    #allocation12 [shape = 'u8[16384]{0}', space=vmem, size = 0x4000, scoped, tag = 'output window, operand 0']
    %11 = vsyncpa [#allocation4], 0
    %s12 = scalar_lea.sflag [#allocation4], 1
    %13 = vsyncpa %s12, 0
    %14 = vsyncpa [#allocation7], 0
    %15 = vsyncpa [#allocation10], 0
    %16 = vsyncpa [#allocation5], 0
    %s17 = scalar_lea.sflag [#allocation5], 1
    %18 = vsyncpa %s17, 0
    loop: start=0, step=1, limit=4
    $region2: #{tpu_custom_call.1} parent=1 // loop_pre_header
      _
    $region3: #{tpu_custom_call.1} parent=1 // loop_header
      %s20 = sphi 0, %s24
      %p21 = scmp.ge.s32.totalorder %s20, 4
      %s27 = sphi 0, %s39
      %s28 = sphi 0, %s35
      %s29 = sphi 0, %s27
      %s30 = sphi 0, %s28
      %s31 = sphi 0, %s29
      %s32 = sphi 0, %s30
      %s42 = sphi 0, %s44
      %s45 = sphi 0, %s42
      %s46 = sphi 0, %s45
      %s62 = sphi 0, %s46
      %s68 = sphi 0, %s70
      %s71 = sphi 0, %s68
      %s72 = sphi 0, %s71
      %s88 = sphi 0, %s72
      %s92 = sphi 0, %s92
      %s94 = sphi 0, %s92
      %s95 = sphi 0, %s94
      %s109 = sphi 0, %s95
      %s113 = sphi 0, %s113
      %s115 = sphi 0, %s113
      %s116 = sphi 0, %s115
      %s130 = sphi 0, %s116
      %s134 = sphi 0, %s134
      %s136 = sphi 0, %s134
      %s137 = sphi 0, %s136
      %s151 = sphi 0, %s137
      %s155 = sphi 0, %s155
      %s157 = sphi 0, %s155
      %s158 = sphi 0, %s157
      %s172 = sphi 0, %s158
      %s178 = sphi 0, %s180
      %s181 = sphi 0, %s178
      %s182 = sphi 0, %s181
      %s198 = sphi 0, %s182
    $region4: #{tpu_custom_call.1} parent=1 // loop_header_branch
      %23 = sbr.rel (%p21) target = $region8
    $region5: #{tpu_custom_call.1} parent=1 // loop_body
      %s25 = ssub.s32 %s20, 1
      %s26 = ssub.s32 %s20, 2
      %s33 = sadd.s32 1, %s28
      %p34 = scmp.ge.s32.totalorder %s33, 1
      %s35 = scalar_select %p34, 0, %s33
      %s36 = sadd.s32 1, %s27
      %s37 = scalar_select %p34, %s36, %s27
      %p38 = scmp.ge.s32.totalorder %s37, 2
      %s39 = scalar_select %p38, 0, %s37
      %s40 = ssub.s32 %s27, %s39
      %p41 = scmp.eq.s32.totalorder %s40, 0
      %s43 = sadd.s32 %s42, 1
      %s44 = scalar_select %p41, %s42, %s43
      %p47 = pneg %p41
      %p48 = scmp.eq.s32.totalorder %s20, 1
      %p49 = por %p47, %p48
      %p50 = scmp.ne.s32.totalorder %s42, %s45
      %p51 = scmp.eq.s32.totalorder %s20, 0
      %p52 = por %p50, %p51
      %p53 = scmp.ne.s32.totalorder %s42, %s45
      %p54 = scmp.eq.s32.totalorder %s25, 1
      %p55 = por %p53, %p54
      %p56 = scmp.ne.s32.totalorder %s45, %s46
      %p57 = scmp.eq.s32.totalorder %s25, 0
      %p58 = por %p56, %p57
      %p59 = scmp.ne.s32.totalorder %s45, %s46
      %p60 = scmp.eq.s32.totalorder %s26, 1
      %p61 = por %p59, %p60
      %p63 = scmp.ne.s32.totalorder %s46, %s62
      %p64 = scmp.eq.s32.totalorder %s26, 0
      %p65 = por %p63, %p64
      %s66 = ssub.s32 %s28, %s35
      %p67 = scmp.eq.s32.totalorder %s66, 0
      %s69 = sadd.s32 %s68, 1
      %s70 = scalar_select %p67, %s68, %s69
      %p73 = pneg %p67
      %p74 = scmp.eq.s32.totalorder %s20, 1
      %p75 = por %p73, %p74
      %p76 = scmp.ne.s32.totalorder %s68, %s71
      %p77 = scmp.eq.s32.totalorder %s20, 0
      %p78 = por %p76, %p77
      %p79 = scmp.ne.s32.totalorder %s68, %s71
      %p80 = scmp.eq.s32.totalorder %s25, 1
      %p81 = por %p79, %p80
      %p82 = scmp.ne.s32.totalorder %s71, %s72
      %p83 = scmp.eq.s32.totalorder %s25, 0
      %p84 = por %p82, %p83
      %p85 = scmp.ne.s32.totalorder %s71, %s72
      %p86 = scmp.eq.s32.totalorder %s26, 1
      %p87 = por %p85, %p86
      %p89 = scmp.ne.s32.totalorder %s72, %s88
      %p90 = scmp.eq.s32.totalorder %s26, 0
      %p91 = por %p89, %p90
      %s93 = sadd.s32 %s92, 1
      %p96 = scmp.eq.s32.totalorder %s20, 1
      %p97 = scmp.ne.s32.totalorder %s92, %s94
      %p98 = scmp.eq.s32.totalorder %s20, 0
      %p99 = por %p97, %p98
      %p100 = scmp.ne.s32.totalorder %s92, %s94
      %p101 = scmp.eq.s32.totalorder %s25, 1
      %p102 = por %p100, %p101
      %p103 = scmp.ne.s32.totalorder %s94, %s95
      %p104 = scmp.eq.s32.totalorder %s25, 0
      %p105 = por %p103, %p104
      %p106 = scmp.ne.s32.totalorder %s94, %s95
      %p107 = scmp.eq.s32.totalorder %s26, 1
      %p108 = por %p106, %p107
      %p110 = scmp.ne.s32.totalorder %s95, %s109
      %p111 = scmp.eq.s32.totalorder %s26, 0
      %p112 = por %p110, %p111
      %s114 = sadd.s32 %s113, 1
      %p117 = scmp.eq.s32.totalorder %s20, 1
      %p118 = scmp.ne.s32.totalorder %s113, %s115
      %p119 = scmp.eq.s32.totalorder %s20, 0
      %p120 = por %p118, %p119
      %p121 = scmp.ne.s32.totalorder %s113, %s115
      %p122 = scmp.eq.s32.totalorder %s25, 1
      %p123 = por %p121, %p122
      %p124 = scmp.ne.s32.totalorder %s115, %s116
      %p125 = scmp.eq.s32.totalorder %s25, 0
      %p126 = por %p124, %p125
      %p127 = scmp.ne.s32.totalorder %s115, %s116
      %p128 = scmp.eq.s32.totalorder %s26, 1
      %p129 = por %p127, %p128
      %p131 = scmp.ne.s32.totalorder %s116, %s130
      %p132 = scmp.eq.s32.totalorder %s26, 0
      %p133 = por %p131, %p132
      %s135 = sadd.s32 %s134, 1
      %p138 = scmp.eq.s32.totalorder %s20, 1
      %p139 = scmp.ne.s32.totalorder %s134, %s136
      %p140 = scmp.eq.s32.totalorder %s20, 0
      %p141 = por %p139, %p140
      %p142 = scmp.ne.s32.totalorder %s134, %s136
      %p143 = scmp.eq.s32.totalorder %s25, 1
      %p144 = por %p142, %p143
      %p145 = scmp.ne.s32.totalorder %s136, %s137
      %p146 = scmp.eq.s32.totalorder %s25, 0
      %p147 = por %p145, %p146
      %p148 = scmp.ne.s32.totalorder %s136, %s137
      %p149 = scmp.eq.s32.totalorder %s26, 1
      %p150 = por %p148, %p149
      %p152 = scmp.ne.s32.totalorder %s137, %s151
      %p153 = scmp.eq.s32.totalorder %s26, 0
      %p154 = por %p152, %p153
      %s156 = sadd.s32 %s155, 1
      %p159 = scmp.eq.s32.totalorder %s20, 1
      %p160 = scmp.ne.s32.totalorder %s155, %s157
      %p161 = scmp.eq.s32.totalorder %s20, 0
      %p162 = por %p160, %p161
      %p163 = scmp.ne.s32.totalorder %s155, %s157
      %p164 = scmp.eq.s32.totalorder %s25, 1
      %p165 = por %p163, %p164
      %p166 = scmp.ne.s32.totalorder %s157, %s158
      %p167 = scmp.eq.s32.totalorder %s25, 0
      %p168 = por %p166, %p167
      %p169 = scmp.ne.s32.totalorder %s157, %s158
      %p170 = scmp.eq.s32.totalorder %s26, 1
      %p171 = por %p169, %p170
      %p173 = scmp.ne.s32.totalorder %s158, %s172
      %p174 = scmp.eq.s32.totalorder %s26, 0
      %p175 = por %p173, %p174
      %s176 = ssub.s32 %s27, %s39
      %p177 = scmp.eq.s32.totalorder %s176, 0
      %s179 = sadd.s32 %s178, 1
      %s180 = scalar_select %p177, %s178, %s179
      %p183 = pneg %p177
      %p184 = scmp.eq.s32.totalorder %s20, 1
      %p185 = por %p183, %p184
      %p186 = scmp.ne.s32.totalorder %s178, %s181
      %p187 = scmp.eq.s32.totalorder %s20, 0
      %p188 = por %p186, %p187
      %p189 = scmp.ne.s32.totalorder %s178, %s181
      %p190 = scmp.eq.s32.totalorder %s25, 1
      %p191 = por %p189, %p190
      %p192 = scmp.ne.s32.totalorder %s181, %s182
      %p193 = scmp.eq.s32.totalorder %s25, 0
      %p194 = por %p192, %p193
      %p195 = scmp.ne.s32.totalorder %s181, %s182
      %p196 = scmp.eq.s32.totalorder %s26, 1
      %p197 = por %p195, %p196
      %p199 = scmp.ne.s32.totalorder %s182, %s198
      %p200 = scmp.eq.s32.totalorder %s26, 0
      %p201 = por %p199, %p200
      %p202 = scmp.le.s32.totalorder 1, %s20
      %p203 = scmp.lt.s32.totalorder %s20, 3
      %p204 = pnand %p202, %p203
      %p205 = pneg %p204
      // Predicated region
      $region9: #{tpu_custom_call.1} parent=5 // pred_check
        _
      $region10: #{tpu_custom_call.1} parent=5 // pred_check_branch
        %207 = sbr.rel (%p204) target = $region12
      $region11: #{tpu_custom_call.1} parent=5 // pred_region
        %s208 = ssub.s32 %s20, 1
        // Predicated region
        $region13: #{tpu_custom_call.1} parent=11 // pred_check
          %p209 = pneg %p84
        $region14: #{tpu_custom_call.1} parent=11 // pred_check_branch
          %211 = sbr.rel (%p209) target = $region16
        $region15: #{tpu_custom_call.1} parent=11 // pred_region
          %s212 = smul.u32 16, %s30
          %s214 = ssub.s32 4096, 4096
          %215 = vsyncadd [#allocation7], %s214
          %s216 = smul.addr %s212, 2
          %s217 = smul.addr %s216, 128
          %s218 = scalar_lea.hbm %s1, %s217
          %s219 = sshll.u32 [#allocation6], 4
          %s220 = int_to_ptr.vmem [resolvable:$true] %s219
          %225 = dma.hbm_to_vmem [thread:$0]  %s218, 4096, %s220, [#allocation7], 128, 128, 8
        $region16: #{tpu_custom_call.1} parent=11 // pred_fallthru
          _
        // Predicated region
        $region17: #{tpu_custom_call.1} parent=11 // pred_check
          %p226 = pneg %p105
        $region18: #{tpu_custom_call.1} parent=11 // pred_check_branch
          %228 = sbr.rel (%p226) target = $region20
        $region19: #{tpu_custom_call.1} parent=11 // pred_region
          %s230 = ssub.s32 256, 256
          %231 = vsyncadd [#allocation7], %s230
          %s232 = sshll.u32 [#allocation8], 4
          %s233 = int_to_ptr.vmem [resolvable:$true] %s232
          %238 = dma.hbm_to_vmem [thread:$0]  %s2, 256, %s233, [#allocation7], 128, 128, 8
        $region20: #{tpu_custom_call.1} parent=11 // pred_fallthru
          _
        // Predicated region
        $region21: #{tpu_custom_call.1} parent=11 // pred_check
          %p239 = pneg %p126
        $region22: #{tpu_custom_call.1} parent=11 // pred_check_branch
          %241 = sbr.rel (%p239) target = $region24
        $region23: #{tpu_custom_call.1} parent=11 // pred_region
          %s243 = ssub.s32 256, 256
          %244 = vsyncadd [#allocation10], %s243
          %s245 = sshll.u32 [#allocation9], 4
          %s246 = int_to_ptr.vmem [resolvable:$true] %s245
          %251 = dma.hbm_to_vmem [thread:$0]  %s3, 256, %s246, [#allocation10], 128, 128, 8
        $region24: #{tpu_custom_call.1} parent=11 // pred_fallthru
          _
        // Predicated region
        $region25: #{tpu_custom_call.1} parent=11 // pred_check
          %p252 = pneg %p147
        $region26: #{tpu_custom_call.1} parent=11 // pred_check_branch
          %254 = sbr.rel (%p252) target = $region28
        $region27: #{tpu_custom_call.1} parent=11 // pred_region
          _
        $region28: #{tpu_custom_call.1} parent=11 // pred_fallthru
          _
        // Predicated region
        $region29: #{tpu_custom_call.1} parent=11 // pred_check
          %p255 = pneg %p168
        $region30: #{tpu_custom_call.1} parent=11 // pred_check_branch
          %257 = sbr.rel (%p255) target = $region32
        $region31: #{tpu_custom_call.1} parent=11 // pred_region
          %s259 = ssub.s32 2048, 2048
          %260 = vsyncadd [#allocation10], %s259
          %s261 = sshll.u32 [#allocation11], 4
          %s262 = int_to_ptr.vmem [resolvable:$true] %s261
          %267 = dma.hbm_to_vmem [thread:$0]  %s5, 2048, %s262, [#allocation10], 128, 128, 8
        $region32: #{tpu_custom_call.1} parent=11 // pred_fallthru
          _
      $region12: #{tpu_custom_call.1} parent=5 // pred_fallthru
        _
      %p268 = scmp.lt.s32.totalorder %s20, 2
      // Predicated region
      $region33: #{tpu_custom_call.1} parent=5 // pred_check
        %p269 = pneg %p268
      $region34: #{tpu_custom_call.1} parent=5 // pred_check_branch
        %271 = sbr.rel (%p269) target = $region36
      $region35: #{tpu_custom_call.1} parent=5 // pred_region
        // Predicated region
        $region37: #{tpu_custom_call.1} parent=35 // pred_check
          %p272 = pneg %p52
        $region38: #{tpu_custom_call.1} parent=35 // pred_check_branch
          %274 = sbr.rel (%p272) target = $region40
        $region39: #{tpu_custom_call.1} parent=35 // pred_region
          %s275 = sand.u32 %s42, 1
          %s276 = scalar_lea.sflag [#allocation4], %s275
          %s277 = sand.u32 %s42, 1
          %s278 = smul.addr %s277, 16
          %s279 = scalar_lea.vmem [#allocation3], %s278
          %s281 = ssub.s32 256, 256
          %282 = vsyncadd %s276, %s281
          %s283 = smul.addr %s27, 2
          %s284 = smul.addr %s283, 128
          %s285 = scalar_lea.hbm %s0, %s284
          %s286 = sshll.u32 %s279, 4
          %s287 = int_to_ptr.vmem [resolvable:$true] %s286
          %292 = dma.hbm_to_vmem [thread:$0]  %s285, 256, %s287, %s276, 128, 128, 8
        $region40: #{tpu_custom_call.1} parent=35 // pred_fallthru
          _
      $region36: #{tpu_custom_call.1} parent=5 // pred_fallthru
        _
      %p293 = scmp.le.s32.totalorder 1, %s20
      %p294 = scmp.lt.s32.totalorder %s20, 3
      %p295 = pnand %p293, %p294
      %p296 = pneg %p295
      // Predicated region
      $region41: #{tpu_custom_call.1} parent=5 // pred_check
        _
      $region42: #{tpu_custom_call.1} parent=5 // pred_check_branch
        %298 = sbr.rel (%p295) target = $region44
      $region43: #{tpu_custom_call.1} parent=5 // pred_region
        %s299 = ssub.s32 %s20, 1
        %s300 = sand.u32 %s45, 1
        %s301 = scalar_lea.sflag [#allocation4], %s300
        %s302 = sand.u32 %s45, 1
        %s303 = smul.addr %s302, 16
        %s304 = scalar_lea.vmem [#allocation3], %s303
        // Predicated region
        $region45: #{tpu_custom_call.1} parent=43 // pred_check
          %p305 = pneg %p58
        $region46: #{tpu_custom_call.1} parent=43 // pred_check_branch
          %307 = sbr.rel (%p305) target = $region48
        $region47: #{tpu_custom_call.1} parent=43 // pred_region
          %308 = dma.done %s301, 256
        $region48: #{tpu_custom_call.1} parent=43 // pred_fallthru
          _
        // Predicated region
        $region49: #{tpu_custom_call.1} parent=43 // pred_check
          %p309 = pneg %p84
        $region50: #{tpu_custom_call.1} parent=43 // pred_check_branch
          %311 = sbr.rel (%p309) target = $region52
        $region51: #{tpu_custom_call.1} parent=43 // pred_region
          %312 = dma.done [#allocation7], 4096
        $region52: #{tpu_custom_call.1} parent=43 // pred_fallthru
          _
        // Predicated region
        $region53: #{tpu_custom_call.1} parent=43 // pred_check
          %p313 = pneg %p105
        $region54: #{tpu_custom_call.1} parent=43 // pred_check_branch
          %315 = sbr.rel (%p313) target = $region56
        $region55: #{tpu_custom_call.1} parent=43 // pred_region
          %316 = dma.done [#allocation7], 256
        $region56: #{tpu_custom_call.1} parent=43 // pred_fallthru
          _
        // Predicated region
        $region57: #{tpu_custom_call.1} parent=43 // pred_check
          %p317 = pneg %p126
        $region58: #{tpu_custom_call.1} parent=43 // pred_check_branch
          %319 = sbr.rel (%p317) target = $region60
        $region59: #{tpu_custom_call.1} parent=43 // pred_region
          %320 = dma.done [#allocation10], 256
        $region60: #{tpu_custom_call.1} parent=43 // pred_fallthru
          _
        // Predicated region
        $region61: #{tpu_custom_call.1} parent=43 // pred_check
          %p321 = pneg %p168
        $region62: #{tpu_custom_call.1} parent=43 // pred_check_branch
          %323 = sbr.rel (%p321) target = $region64
        $region63: #{tpu_custom_call.1} parent=43 // pred_region
          %324 = dma.done [#allocation10], 2048
        $region64: #{tpu_custom_call.1} parent=43 // pred_fallthru
          _
        %s325 = sand.u32 %s45, 1
        %s326 = scalar_lea.sflag [#allocation4], %s325
        %s327 = sand.u32 %s45, 1
        %s328 = smul.addr %s327, 16
        %s329 = scalar_lea.vmem [#allocation3], %s328
        %p330 = pneg %p58
        %p331 = pneg %p55
        %p332 = pneg %p84
        %p333 = pneg %p81
        %p334 = pneg %p105
        %p335 = pneg %p102
        %p336 = pneg %p126
        %p337 = pneg %p123
        %p338 = pneg %p147
        %p339 = pneg %p144
        %p340 = pneg %p168
        %p341 = pneg %p165
        %p342 = pneg %p194
        %p343 = pneg %p191
        %s344 = sand.u32 %s181, 1
        %s345 = scalar_lea.sflag [#allocation5], %s344
        %s346 = sand.u32 %s181, 1
        %s347 = smul.addr %s346, 16
        %s348 = scalar_lea.vmem [#allocation12], %s347
        %s349 = smul.u32 16, %s30
        %p350 = scmp.eq.s32.totalorder %s30, 0
        // Predicated region
        $region65: #{tpu_custom_call.1} parent=43 // pred_check
          %p351 = pneg %p350
        $region66: #{tpu_custom_call.1} parent=43 // pred_check_branch
          %353 = sbr.rel (%p351) target = $region68
        $region67: #{tpu_custom_call.1} parent=43 // pred_region
          %354 = vst [vmem:[#allocation2] sm:$0xff] 0.0
          %355 = vst [vmem:[#allocation2 + $0x8] sm:$0xff] 0.0
        $region68: #{tpu_custom_call.1} parent=43 // pred_fallthru
          _
        %s356 = smul.u32 %s30, 16
        %v357 = vld [vmem:[#allocation2] sm:$0xff]
        %v358 = vld [vmem:[#allocation2 + $0x8] sm:$0xff]
        %s359 = scalar_lea.vmem %s304, %s356 [#allocation3]
        %v360 = vld [vmem:[%s359] sm:$0x1]
        %v361 = vld [vmem:[#allocation6] sm:$0xff]
        %v362 = vld [vmem:[#allocation6 + $0x8] sm:$0xff]
        %v363 = vlaneseq
        %v364 = vshrl.u32 %v363, 7
        %v365 = vsub.s32 0, %v364
        %v366 = vrot.slane %v360, %v365
        %v367 = vmul.f32 %v366, %v361
        %v368 = vmul.f32 %v366, %v362
        %v369 = vadd.f32 %v357, %v367
        %v370 = vadd.f32 %v358, %v368
        %s371 = sadd.s32 %s356, 1
        %s372 = scalar_lea.vmem %s304, %s371 [#allocation3]
        %v373 = vld [vmem:[%s372] sm:$0x1]
        %s374 = scalar_lea.vmem [#allocation6], 16
        %v375 = vld [vmem:[%s374] sm:$0xff]
        %v376 = vld [vmem:[%s374 + $0x8] sm:$0xff]
        %v377 = vlaneseq
        %v378 = vshrl.u32 %v377, 7
        %v379 = vsub.s32 0, %v378
        %v380 = vrot.slane %v373, %v379
        %v381 = vmul.f32 %v380, %v375
        %v382 = vmul.f32 %v380, %v376
        %v383 = vadd.f32 %v369, %v381
        %v384 = vadd.f32 %v370, %v382
        %s385 = sadd.s32 %s356, 2
        %s386 = scalar_lea.vmem %s304, %s385 [#allocation3]
        %v387 = vld [vmem:[%s386] sm:$0x1]
        %s388 = scalar_lea.vmem [#allocation6], 32
        %v389 = vld [vmem:[%s388] sm:$0xff]
        %v390 = vld [vmem:[%s388 + $0x8] sm:$0xff]
        %v391 = vlaneseq
        %v392 = vshrl.u32 %v391, 7
        %v393 = vsub.s32 0, %v392
        %v394 = vrot.slane %v387, %v393
        %v395 = vmul.f32 %v394, %v389
        %v396 = vmul.f32 %v394, %v390
        %v397 = vadd.f32 %v383, %v395
        %v398 = vadd.f32 %v384, %v396
        %s399 = sadd.s32 %s356, 3
        %s400 = scalar_lea.vmem %s304, %s399 [#allocation3]
        %v401 = vld [vmem:[%s400] sm:$0x1]
        %s402 = scalar_lea.vmem [#allocation6], 48
        %v403 = vld [vmem:[%s402] sm:$0xff]
        %v404 = vld [vmem:[%s402 + $0x8] sm:$0xff]
        %v405 = vlaneseq
        %v406 = vshrl.u32 %v405, 7
        %v407 = vsub.s32 0, %v406
        %v408 = vrot.slane %v401, %v407
        %v409 = vmul.f32 %v408, %v403
        %v410 = vmul.f32 %v408, %v404
        %v411 = vadd.f32 %v397, %v409
        %v412 = vadd.f32 %v398, %v410
        %s413 = sadd.s32 %s356, 4
        %s414 = scalar_lea.vmem %s304, %s413 [#allocation3]
        %v415 = vld [vmem:[%s414] sm:$0x1]
        %s416 = scalar_lea.vmem [#allocation6], 64
        %v417 = vld [vmem:[%s416] sm:$0xff]
        %v418 = vld [vmem:[%s416 + $0x8] sm:$0xff]
        %v419 = vlaneseq
        %v420 = vshrl.u32 %v419, 7
        %v421 = vsub.s32 0, %v420
        %v422 = vrot.slane %v415, %v421
        %v423 = vmul.f32 %v422, %v417
        %v424 = vmul.f32 %v422, %v418
        %v425 = vadd.f32 %v411, %v423
        %v426 = vadd.f32 %v412, %v424
        %s427 = sadd.s32 %s356, 5
        %s428 = scalar_lea.vmem %s304, %s427 [#allocation3]
        %v429 = vld [vmem:[%s428] sm:$0x1]
        %s430 = scalar_lea.vmem [#allocation6], 80
        %v431 = vld [vmem:[%s430] sm:$0xff]
        %v432 = vld [vmem:[%s430 + $0x8] sm:$0xff]
        %v433 = vlaneseq
        %v434 = vshrl.u32 %v433, 7
        %v435 = vsub.s32 0, %v434
        %v436 = vrot.slane %v429, %v435
        %v437 = vmul.f32 %v436, %v431
        %v438 = vmul.f32 %v436, %v432
        %v439 = vadd.f32 %v425, %v437
        %v440 = vadd.f32 %v426, %v438
        %s441 = sadd.s32 %s356, 6
        %s442 = scalar_lea.vmem %s304, %s441 [#allocation3]
        %v443 = vld [vmem:[%s442] sm:$0x1]
        %s444 = scalar_lea.vmem [#allocation6], 96
        %v445 = vld [vmem:[%s444] sm:$0xff]
        %v446 = vld [vmem:[%s444 + $0x8] sm:$0xff]
        %v447 = vlaneseq
        %v448 = vshrl.u32 %v447, 7
        %v449 = vsub.s32 0, %v448
        %v450 = vrot.slane %v443, %v449
        %v451 = vmul.f32 %v450, %v445
        %v452 = vmul.f32 %v450, %v446
        %v453 = vadd.f32 %v439, %v451
        %v454 = vadd.f32 %v440, %v452
        %s455 = sadd.s32 %s356, 7
        %s456 = scalar_lea.vmem %s304, %s455 [#allocation3]
        %v457 = vld [vmem:[%s456] sm:$0x1]
        %s458 = scalar_lea.vmem [#allocation6], 112
        %v459 = vld [vmem:[%s458] sm:$0xff]
        %v460 = vld [vmem:[%s458 + $0x8] sm:$0xff]
        %v461 = vlaneseq
        %v462 = vshrl.u32 %v461, 7
        %v463 = vsub.s32 0, %v462
        %v464 = vrot.slane %v457, %v463
        %v465 = vmul.f32 %v464, %v459
        %v466 = vmul.f32 %v464, %v460
        %v467 = vadd.f32 %v453, %v465
        %v468 = vadd.f32 %v454, %v466
        %s469 = sadd.s32 %s356, 8
        %s470 = scalar_lea.vmem %s304, %s469 [#allocation3]
        %v471 = vld [vmem:[%s470] sm:$0x1]
        %s472 = scalar_lea.vmem [#allocation6], 128
        %v473 = vld [vmem:[%s472] sm:$0xff]
        %v474 = vld [vmem:[%s472 + $0x8] sm:$0xff]
        %v475 = vlaneseq
        %v476 = vshrl.u32 %v475, 7
        %v477 = vsub.s32 0, %v476
        %v478 = vrot.slane %v471, %v477
        %v479 = vmul.f32 %v478, %v473
        %v480 = vmul.f32 %v478, %v474
        %v481 = vadd.f32 %v467, %v479
        %v482 = vadd.f32 %v468, %v480
        %s483 = sadd.s32 %s356, 9
        %s484 = scalar_lea.vmem %s304, %s483 [#allocation3]
        %v485 = vld [vmem:[%s484] sm:$0x1]
        %s486 = scalar_lea.vmem [#allocation6], 144
        %v487 = vld [vmem:[%s486] sm:$0xff]
        %v488 = vld [vmem:[%s486 + $0x8] sm:$0xff]
        %v489 = vlaneseq
        %v490 = vshrl.u32 %v489, 7
        %v491 = vsub.s32 0, %v490
        %v492 = vrot.slane %v485, %v491
        %v493 = vmul.f32 %v492, %v487
        %v494 = vmul.f32 %v492, %v488
        %v495 = vadd.f32 %v481, %v493
        %v496 = vadd.f32 %v482, %v494
        %s497 = sadd.s32 %s356, 10
        %s498 = scalar_lea.vmem %s304, %s497 [#allocation3]
        %v499 = vld [vmem:[%s498] sm:$0x1]
        %s500 = scalar_lea.vmem [#allocation6], 160
        %v501 = vld [vmem:[%s500] sm:$0xff]
        %v502 = vld [vmem:[%s500 + $0x8] sm:$0xff]
        %v503 = vlaneseq
        %v504 = vshrl.u32 %v503, 7
        %v505 = vsub.s32 0, %v504
        %v506 = vrot.slane %v499, %v505
        %v507 = vmul.f32 %v506, %v501
        %v508 = vmul.f32 %v506, %v502
        %v509 = vadd.f32 %v495, %v507
        %v510 = vadd.f32 %v496, %v508
        %s511 = sadd.s32 %s356, 11
        %s512 = scalar_lea.vmem %s304, %s511 [#allocation3]
        %v513 = vld [vmem:[%s512] sm:$0x1]
        %s514 = scalar_lea.vmem [#allocation6], 176
        %v515 = vld [vmem:[%s514] sm:$0xff]
        %v516 = vld [vmem:[%s514 + $0x8] sm:$0xff]
        %v517 = vlaneseq
        %v518 = vshrl.u32 %v517, 7
        %v519 = vsub.s32 0, %v518
        %v520 = vrot.slane %v513, %v519
        %v521 = vmul.f32 %v520, %v515
        %v522 = vmul.f32 %v520, %v516
        %v523 = vadd.f32 %v509, %v521
        %v524 = vadd.f32 %v510, %v522
        %s525 = sadd.s32 %s356, 12
        %s526 = scalar_lea.vmem %s304, %s525 [#allocation3]
        %v527 = vld [vmem:[%s526] sm:$0x1]
        %s528 = scalar_lea.vmem [#allocation6], 192
        %v529 = vld [vmem:[%s528] sm:$0xff]
        %v530 = vld [vmem:[%s528 + $0x8] sm:$0xff]
        %v531 = vlaneseq
        %v532 = vshrl.u32 %v531, 7
        %v533 = vsub.s32 0, %v532
        %v534 = vrot.slane %v527, %v533
        %v535 = vmul.f32 %v534, %v529
        %v536 = vmul.f32 %v534, %v530
        %v537 = vadd.f32 %v523, %v535
        %v538 = vadd.f32 %v524, %v536
        %s539 = sadd.s32 %s356, 13
        %s540 = scalar_lea.vmem %s304, %s539 [#allocation3]
        %v541 = vld [vmem:[%s540] sm:$0x1]
        %s542 = scalar_lea.vmem [#allocation6], 208
        %v543 = vld [vmem:[%s542] sm:$0xff]
        %v544 = vld [vmem:[%s542 + $0x8] sm:$0xff]
        %v545 = vlaneseq
        %v546 = vshrl.u32 %v545, 7
        %v547 = vsub.s32 0, %v546
        %v548 = vrot.slane %v541, %v547
        %v549 = vmul.f32 %v548, %v543
        %v550 = vmul.f32 %v548, %v544
        %v551 = vadd.f32 %v537, %v549
        %v552 = vadd.f32 %v538, %v550
        %s553 = sadd.s32 %s356, 14
        %s554 = scalar_lea.vmem %s304, %s553 [#allocation3]
        %v555 = vld [vmem:[%s554] sm:$0x1]
        %s556 = scalar_lea.vmem [#allocation6], 224
        %v557 = vld [vmem:[%s556] sm:$0xff]
        %v558 = vld [vmem:[%s556 + $0x8] sm:$0xff]
        %v559 = vlaneseq
        %v560 = vshrl.u32 %v559, 7
        %v561 = vsub.s32 0, %v560
        %v562 = vrot.slane %v555, %v561
        %v563 = vmul.f32 %v562, %v557
        %v564 = vmul.f32 %v562, %v558
        %v565 = vadd.f32 %v551, %v563
        %v566 = vadd.f32 %v552, %v564
        %s567 = sadd.s32 %s356, 15
        %s568 = scalar_lea.vmem %s304, %s567 [#allocation3]
        %v569 = vld [vmem:[%s568] sm:$0x1]
        %s570 = scalar_lea.vmem [#allocation6], 240
        %v571 = vld [vmem:[%s570] sm:$0xff]
        %v572 = vld [vmem:[%s570 + $0x8] sm:$0xff]
        %v573 = vlaneseq
        %v574 = vshrl.u32 %v573, 7
        %v575 = vsub.s32 0, %v574
        %v576 = vrot.slane %v569, %v575
        %v577 = vmul.f32 %v576, %v571
        %v578 = vmul.f32 %v576, %v572
        %v579 = vadd.f32 %v565, %v577
        %v580 = vadd.f32 %v566, %v578
        %s581 = sadd.s32 %s30, 1
        %p582 = scmp.lt.s32.totalorder %s581, 1
        // Predicated region
        $region69: #{tpu_custom_call.1} parent=43 // pred_check
          %p583 = pneg %p582
        $region70: #{tpu_custom_call.1} parent=43 // pred_check_branch
          %585 = sbr.rel (%p583) target = $region72
        $region71: #{tpu_custom_call.1} parent=43 // pred_region
          %586 = vst [vmem:[#allocation2] sm:$0xff] %v579
          %587 = vst [vmem:[#allocation2 + $0x8] sm:$0xff] %v580
        $region72: #{tpu_custom_call.1} parent=43 // pred_fallthru
          _
        %p588 = scmp.eq.s32.totalorder %s581, 1
        // Predicated region
        $region73: #{tpu_custom_call.1} parent=43 // pred_check
          %p589 = pneg %p588
        $region74: #{tpu_custom_call.1} parent=43 // pred_check_branch
          %591 = sbr.rel (%p589) target = $region76
        $region75: #{tpu_custom_call.1} parent=43 // pred_region
          %v592 = vld [vmem:[%s304 + $0xf] sm:$0x1]
          %v593 = vld [vmem:[#allocation8] sm:$0xff]
          %v594 = vld [vmem:[#allocation8 + $0x8] sm:$0xff]
          %v595 = vadd.f32 %v579, %v593
          %v596 = vadd.f32 %v580, %v594
          %v597 = vld [vmem:[#allocation9] sm:$0xff]
          %v598 = vld [vmem:[#allocation9 + $0x8] sm:$0xff]
          %v599 = vlaneseq
          %v600 = vshrl.u32 %v599, 7
          %v601 = vsub.s32 0, %v600
          %v602 = vrot.slane %v592, %v601
          %v603 = vmul.f32 %v602, %v597
          %v604 = vmul.f32 %v602, %v598
          %v605 = vadd.f32 %v595, %v603
          %v606 = vadd.f32 %v596, %v604
          %v607 = vmul.f32 %v606, 2.0
          %v608 = vmul.f32 %v607, 1.442695
          %v609 = vpow.pop %v608
          %v610 = vld [vmem:[#allocation11] sm:$0xff]
          %v611 = vld [vmem:[#allocation11 + $0x8] sm:$0xff]
          %v612 = vld [vmem:[#allocation11 + $0x10] sm:$0xff]
          %v613 = vld [vmem:[#allocation11 + $0x18] sm:$0xff]
          %v614 = vld [vmem:[#allocation11 + $0x20] sm:$0xff]
          %v615 = vld [vmem:[#allocation11 + $0x28] sm:$0xff]
          %v616 = vld [vmem:[#allocation11 + $0x30] sm:$0xff]
          %v617 = vld [vmem:[#allocation11 + $0x38] sm:$0xff]
          %v618 = vld [vmem:[#allocation11 + $0x40] sm:$0xff]
          %v619 = vld [vmem:[#allocation11 + $0x48] sm:$0xff]
          %v620 = vld [vmem:[#allocation11 + $0x50] sm:$0xff]
          %v621 = vld [vmem:[#allocation11 + $0x58] sm:$0xff]
          %v622 = vld [vmem:[#allocation11 + $0x60] sm:$0xff]
          %v623 = vld [vmem:[#allocation11 + $0x68] sm:$0xff]
          %v624 = vld [vmem:[#allocation11 + $0x70] sm:$0xff]
          %v625 = vld [vmem:[#allocation11 + $0x78] sm:$0xff]
          %626 = vmatprep.subr.mxu0 0.0
          %627 = vmatpush1.msra.mxu0 %v610
          %628 = vmatprep.subr.mxu0 0.0
          %629 = vmatpush1.msra.mxu0 %v611
          %630 = vmatprep.subr.mxu0 0.0
          %631 = vmatpush1.msra.mxu0 %v612
          %632 = vmatprep.subr.mxu0 0.0
          %633 = vmatpush1.msra.mxu0 %v613
          %634 = vmatprep.subr.mxu0 0.0
          %635 = vmatpush1.msra.mxu0 %v614
          %636 = vmatprep.subr.mxu0 0.0
          %637 = vmatpush1.msra.mxu0 %v615
          %638 = vmatprep.subr.mxu0 0.0
          %639 = vmatpush1.msra.mxu0 %v616
          %640 = vmatprep.subr.mxu0 0.0
          %641 = vmatpush1.msra.mxu0 %v617
          %642 = vmatprep.subr.mxu0 0.0
          %643 = vmatpush1.msra.mxu0 %v618
          %644 = vmatprep.subr.mxu0 0.0
          %645 = vmatpush1.msra.mxu0 %v619
          %646 = vmatprep.subr.mxu0 0.0
          %647 = vmatpush1.msra.mxu0 %v620
          %648 = vmatprep.subr.mxu0 0.0
          %649 = vmatpush1.msra.mxu0 %v621
          %650 = vmatprep.subr.mxu0 0.0
          %651 = vmatpush1.msra.mxu0 %v622
          %652 = vmatprep.subr.mxu0 0.0
          %653 = vmatpush1.msra.mxu0 %v623
          %654 = vmatprep.subr.mxu0 0.0
          %655 = vmatpush1.msra.mxu0 %v624
          %656 = vmatprep.subr.mxu0 0.0
          %657 = vmatpush1.msra.mxu0 %v625
          %658 = vmatprep.subr.mxu0 0.0
          %659 = vmatpush1.msra.mxu0 0.0
          %660 = vmatprep.subr.mxu0 0.0
          %661 = vmatpush1.msra.mxu0 0.0
          %662 = vmatprep.subr.mxu0 0.0
          %663 = vmatpush1.msra.mxu0 0.0
          %664 = vmatprep.subr.mxu0 0.0
          %665 = vmatpush1.msra.mxu0 0.0
          %666 = vmatprep.subr.mxu0 0.0
          %667 = vmatpush1.msra.mxu0 0.0
          %668 = vmatprep.subr.mxu0 0.0
          %669 = vmatpush1.msra.mxu0 0.0
          %670 = vmatprep.subr.mxu0 0.0
          %671 = vmatpush1.msra.mxu0 0.0
          %672 = vmatprep.subr.mxu0 0.0
          %673 = vmatpush1.msra.mxu0 0.0
          %674 = vmatprep.subr.mxu0 0.0
          %675 = vmatpush1.msra.mxu0 0.0
          %676 = vmatprep.subr.mxu0 0.0
          %677 = vmatpush1.msra.mxu0 0.0
          %678 = vmatprep.subr.mxu0 0.0
          %679 = vmatpush1.msra.mxu0 0.0
          %680 = vmatprep.subr.mxu0 0.0
          %681 = vmatpush1.msra.mxu0 0.0
          %682 = vmatprep.subr.mxu0 0.0
          %683 = vmatpush1.msra.mxu0 0.0
          %684 = vmatprep.subr.mxu0 0.0
          %685 = vmatpush1.msra.mxu0 0.0
          %686 = vmatprep.subr.mxu0 0.0
          %687 = vmatpush1.msra.mxu0 0.0
          %688 = vmatprep.subr.mxu0 0.0
          %689 = vmatpush1.msra.mxu0 0.0
          %690 = vmatprep.mubr.f32.mxu0 0.0
          %691 = vmatmul.mubr.f32.gmra.mrb[0].mxu0 %v605
          %v692 = vpop.f32.mrb[0].mxu0
          %v693 = vadd.f32 0.0, %v692
          %v694 = vpop.f32.mrb[0].mxu0
          %695 = vdwg.mxu0
          %696 = vmatprep.subr.mxu0 0.0
          %697 = vmatpush1.msra.mxu0 %v610
          %698 = vmatprep.subr.mxu0 0.0
          %699 = vmatpush1.msra.mxu0 %v611
          %700 = vmatprep.subr.mxu0 0.0
          %701 = vmatpush1.msra.mxu0 %v612
          %702 = vmatprep.subr.mxu0 0.0
          %703 = vmatpush1.msra.mxu0 %v613
          %704 = vmatprep.subr.mxu0 0.0
          %705 = vmatpush1.msra.mxu0 %v614
          %706 = vmatprep.subr.mxu0 0.0
          %707 = vmatpush1.msra.mxu0 %v615
          %708 = vmatprep.subr.mxu0 0.0
          %709 = vmatpush1.msra.mxu0 %v616
          %710 = vmatprep.subr.mxu0 0.0
          %711 = vmatpush1.msra.mxu0 %v617
          %712 = vmatprep.subr.mxu0 0.0
          %713 = vmatpush1.msra.mxu0 %v618
          %714 = vmatprep.subr.mxu0 0.0
          %715 = vmatpush1.msra.mxu0 %v619
          %716 = vmatprep.subr.mxu0 0.0
          %717 = vmatpush1.msra.mxu0 %v620
          %718 = vmatprep.subr.mxu0 0.0
          %719 = vmatpush1.msra.mxu0 %v621
          %720 = vmatprep.subr.mxu0 0.0
          %721 = vmatpush1.msra.mxu0 %v622
          %722 = vmatprep.subr.mxu0 0.0
          %723 = vmatpush1.msra.mxu0 %v623
          %724 = vmatprep.subr.mxu0 0.0
          %725 = vmatpush1.msra.mxu0 %v624
          %726 = vmatprep.subr.mxu0 0.0
          %727 = vmatpush1.msra.mxu0 %v625
          %728 = vmatprep.subr.mxu0 0.0
          %729 = vmatpush1.msra.mxu0 0.0
          %730 = vmatprep.subr.mxu0 0.0
          %731 = vmatpush1.msra.mxu0 0.0
          %732 = vmatprep.subr.mxu0 0.0
          %733 = vmatpush1.msra.mxu0 0.0
          %734 = vmatprep.subr.mxu0 0.0
          %735 = vmatpush1.msra.mxu0 0.0
          %736 = vmatprep.subr.mxu0 0.0
          %737 = vmatpush1.msra.mxu0 0.0
          %738 = vmatprep.subr.mxu0 0.0
          %739 = vmatpush1.msra.mxu0 0.0
          %740 = vmatprep.subr.mxu0 0.0
          %741 = vmatpush1.msra.mxu0 0.0
          %742 = vmatprep.subr.mxu0 0.0
          %743 = vmatpush1.msra.mxu0 0.0
          %744 = vmatprep.subr.mxu0 0.0
          %745 = vmatpush1.msra.mxu0 0.0
          %746 = vmatprep.subr.mxu0 0.0
          %747 = vmatpush1.msra.mxu0 0.0
          %748 = vmatprep.subr.mxu0 0.0
          %749 = vmatpush1.msra.mxu0 0.0
          %750 = vmatprep.subr.mxu0 0.0
          %751 = vmatpush1.msra.mxu0 0.0
          %752 = vmatprep.subr.mxu0 0.0
          %753 = vmatpush1.msra.mxu0 0.0
          %754 = vmatprep.subr.mxu0 0.0
          %755 = vmatpush1.msra.mxu0 0.0
          %756 = vmatprep.subr.mxu0 0.0
          %757 = vmatpush1.msra.mxu0 0.0
          %758 = vmatprep.subr.mxu0 0.0
          %759 = vmatpush1.msra.mxu0 0.0
          %760 = vmatprep.mubr.f32.mxu0 0.0
          %761 = vmatmul.mubr.f32.gmra.mrb[0].mxu0 %v609
          %v762 = vpop.f32.mrb[0].mxu0
          %v763 = vadd.f32 0.0, %v762
          %v764 = vpop.f32.mrb[0].mxu0
          %765 = vdwg.mxu0
          %v766 = vld [vmem:[%s4] sm:$0x1]
          %v767 = vsub.f32 1.0, %v766
          %v769 = vlaneseq
          %v770 = vshrl.u32 %v769, 7
          %v771 = vsub.s32 0, %v770
          %v772 = vrot.slane %v766, %v771
          %v774 = vmul.f32 %v772, %v605
          %v776 = vlaneseq
          %v777 = vshrl.u32 %v776, 7
          %v778 = vsub.s32 0, %v777
          %v779 = vrot.slane %v767, %v778
          %v781 = vmul.f32 %v779, %v693
          %v782 = vadd.f32 %v774, %v781
          %v783 = vmul.f32 %v766, %v766
          %v785 = vlaneseq
          %v786 = vshrl.u32 %v785, 7
          %v787 = vsub.s32 0, %v786
          %v788 = vrot.slane %v783, %v787
          %v790 = vmul.f32 %v788, %v609
          %v791 = vmul.f32 %v767, %v767
          %v793 = vlaneseq
          %v794 = vshrl.u32 %v793, 7
          %v795 = vsub.s32 0, %v794
          %v796 = vrot.slane %v791, %v795
          %v798 = vmul.f32 %v796, %v763
          %v799 = vadd.f32 %v790, %v798
          %800 = vst [vmem:[%s348] sm:$0xff] %v782
          %v801 = vlog2.pop %v799
          %v802 = vmul.f32 %v801, 0.6931472
          %v803 = vmul.f32 %v802, 0.5
          %804 = vst [vmem:[%s348 + $0x8] sm:$0xff] %v803
        $region76: #{tpu_custom_call.1} parent=43 // pred_fallthru
          _
        %s805 = sand.u32 %s181, 1
        %s806 = scalar_lea.sflag [#allocation5], %s805
        %s807 = sand.u32 %s181, 1
        %s808 = smul.addr %s807, 16
        %s809 = scalar_lea.vmem [#allocation12], %s808
        // Predicated region
        $region77: #{tpu_custom_call.1} parent=43 // pred_check
          %p810 = pneg %p191
        $region78: #{tpu_custom_call.1} parent=43 // pred_check_branch
          %812 = sbr.rel (%p810) target = $region80
        $region79: #{tpu_custom_call.1} parent=43 // pred_region
          %s814 = ssub.s32 256, 256
          %815 = vsyncadd %s806, %s814
          %s816 = smul.addr %s29, 2
          %s817 = smul.addr %s816, 128
          %s818 = scalar_lea.hbm %s6, %s817
          %s819 = sshll.u32 %s809, 4
          %s820 = int_to_ptr.vmem [resolvable:$true] %s819
          %825 = dma.vmem_to_hbm [thread:$0]  %s820, 256, %s818, %s806, 128, 128, 8
        $region80: #{tpu_custom_call.1} parent=43 // pred_fallthru
          _
      $region44: #{tpu_custom_call.1} parent=5 // pred_fallthru
        _
      %p826 = scmp.le.s32.totalorder 2, %s20
      // Predicated region
      $region81: #{tpu_custom_call.1} parent=5 // pred_check
        %p827 = pneg %p826
      $region82: #{tpu_custom_call.1} parent=5 // pred_check_branch
        %829 = sbr.rel (%p827) target = $region84
      $region83: #{tpu_custom_call.1} parent=5 // pred_region
        %s830 = ssub.s32 %s20, 2
        // Predicated region
        $region85: #{tpu_custom_call.1} parent=83 // pred_check
          %p831 = pneg %p197
        $region86: #{tpu_custom_call.1} parent=83 // pred_check_branch
          %833 = sbr.rel (%p831) target = $region88
        $region87: #{tpu_custom_call.1} parent=83 // pred_region
          %s834 = sand.u32 %s182, 1
          %s835 = scalar_lea.sflag [#allocation5], %s834
          %s836 = sand.u32 %s182, 1
          %s837 = smul.addr %s836, 16
          %s838 = scalar_lea.vmem [#allocation12], %s837
          %839 = dma.done %s835, 256
        $region88: #{tpu_custom_call.1} parent=83 // pred_fallthru
          _
      $region84: #{tpu_custom_call.1} parent=5 // pred_fallthru
        _
    $region6: #{tpu_custom_call.1} parent=1 // loop_footer
      %s24 = sadd.s32 1, %s20
    $region7: #{tpu_custom_call.1} parent=1 // loop_footer_branch
      %19 = sbr.rel target = $region3
    $region8: #{tpu_custom_call.1} parent=1 // loop_exit
      _
    %840 = vsyncpa [#allocation4], 1
    %s841 = scalar_lea.sflag [#allocation4], 1
    %842 = vsyncpa %s841, 1
    %843 = vsyncpa [#allocation7], 1
    %844 = vsyncpa [#allocation10], 1
    %845 = vsyncpa [#allocation5], 1
    %s846 = scalar_lea.sflag [#allocation5], 1
    %847 = vsyncpa %s846, 1

// kernel: tpu_custom_call.1
$region0: #{tpu_custom_call.1}
  #allocation0 [shape = 'u32[]', space=smem, size = 0x4, offset = 0x4, fixed_abs, tag = 'smem constant byte address 0x4 - core index']
  #allocation1 [shape = 'u32[144,128]{1,0:T(1,128)}', space=vmem, size = 0x12000, scoped, tag = 'internal scratch']
  #allocation2 [shape = 'f32[1,16,128]{2,1,0:T(8,128)}', space=vmem, size = 0x2000, scoped, tag = 'scratch operand']
  %s0 = inlined_call_operand.hbm [shape: f32[2,16,128], index: 0, kind: input, shape index: {}]
  %s1 = inlined_call_operand.hbm [shape: f32[16,16,128], index: 1, kind: input, shape index: {}]
  %s2 = inlined_call_operand.hbm [shape: f32[16,128], index: 2, kind: input, shape index: {}]
  %s3 = inlined_call_operand.hbm [shape: f32[16,128], index: 3, kind: input, shape index: {}]
  %s4 = inlined_call_operand.vmem [shape: f32[1,128], index: 4, kind: input, shape index: {}]
  %s5 = inlined_call_operand.hbm [shape: f32[128,128], index: 5, kind: input, shape index: {}]
  %s6 = inlined_call_operand.hbm [shape: f32[2,16,128], index: 6, kind: output, shape index: {}]
  %s7 = sld [smem:[#allocation0]]
  $region89: #{tpu_custom_call.1} parent=0
    _
  %s9 = ssub.s32 1, %s7
  %s10 = scalar_select 0, %s9, %s7
  $region1: #{tpu_custom_call.1} parent=0
    #allocation3 [shape = 'u8[16384]{0}', space=vmem, size = 0x4000, scoped, tag = 'input window, operand 0']
    #allocation4 [shape = 's32[2]{0}', space=sflag, size = 0x8, scoped, tag = 'scoped memory for tpu_custom_call.1']
    #allocation5 [shape = 's32[2]{0}', space=sflag, size = 0x8, scoped, tag = 'scoped memory for tpu_custom_call.1']
    #allocation6 [shape = 'u8[131072]{0}', space=vmem, size = 0x20000, scoped, tag = 'input window, operand 1, single buffered']
    #allocation7 [shape = 's32[1]{0}', space=sflag, size = 0x4, scoped, tag = 'scoped memory for tpu_custom_call.1']
    #allocation8 [shape = 'u8[8192]{0}', space=vmem, size = 0x2000, scoped, tag = 'input window, operand 2, single buffered']
    #allocation9 [shape = 'u8[8192]{0}', space=vmem, size = 0x2000, scoped, tag = 'input window, operand 3, single buffered']
    #allocation10 [shape = 's32[1]{0}', space=sflag, size = 0x4, scoped, tag = 'scoped memory for tpu_custom_call.1']
    #allocation11 [shape = 'u8[65536]{0}', space=vmem, size = 0x10000, scoped, tag = 'input window, operand 5, single buffered']
    #allocation12 [shape = 'u8[16384]{0}', space=vmem, size = 0x4000, scoped, tag = 'output window, operand 0']
    %11 = vsyncpa [#allocation4], 0
    %s12 = scalar_lea.sflag [#allocation4], 1
    %13 = vsyncpa %s12, 0
    %14 = vsyncpa [#allocation7], 0
    %15 = vsyncpa [#allocation10], 0
    %16 = vsyncpa [#allocation5], 0
    %s17 = scalar_lea.sflag [#allocation5], 1
    %18 = vsyncpa %s17, 0
    loop: start=0, step=1, limit=4
    $region2: #{tpu_custom_call.1} parent=1 // loop_pre_header
      _
    $region3: #{tpu_custom_call.1} parent=1 // loop_header
      %s20 = sphi 0, %s24
      %p21 = scmp.ge.s32.totalorder %s20, 4
      %s27 = sphi 0, %s39
      %s28 = sphi 0, %s35
      %s29 = sphi 0, %s27
      %s30 = sphi 0, %s28
      %s31 = sphi 0, %s29
      %s32 = sphi 0, %s30
      %s42 = sphi 0, %s44
      %s45 = sphi 0, %s42
      %s46 = sphi 0, %s45
      %s62 = sphi 0, %s46
      %s68 = sphi 0, %s70
      %s71 = sphi 0, %s68
      %s72 = sphi 0, %s71
      %s88 = sphi 0, %s72
      %s92 = sphi 0, %s92
      %s94 = sphi 0, %s92
      %s95 = sphi 0, %s94
      %s109 = sphi 0, %s95
      %s113 = sphi 0, %s113
      %s115 = sphi 0, %s113
      %s116 = sphi 0, %s115
      %s130 = sphi 0, %s116
      %s134 = sphi 0, %s134
      %s136 = sphi 0, %s134
      %s137 = sphi 0, %s136
      %s151 = sphi 0, %s137
      %s155 = sphi 0, %s155
      %s157 = sphi 0, %s155
      %s158 = sphi 0, %s157
      %s172 = sphi 0, %s158
      %s178 = sphi 0, %s180
      %s181 = sphi 0, %s178
      %s182 = sphi 0, %s181
      %s198 = sphi 0, %s182
    $region4: #{tpu_custom_call.1} parent=1 // loop_header_branch
      %23 = sbr.rel (%p21) target = $region8
    $region5: #{tpu_custom_call.1} parent=1 // loop_body
      %s25 = ssub.s32 %s20, 1
      %s26 = ssub.s32 %s20, 2
      %s33 = sadd.s32 1, %s28
      %p34 = scmp.ge.s32.totalorder %s33, 1
      %s35 = scalar_select %p34, 0, %s33
      %s36 = sadd.s32 1, %s27
      %s37 = scalar_select %p34, %s36, %s27
      %p38 = scmp.ge.s32.totalorder %s37, 2
      %s39 = scalar_select %p38, 0, %s37
      %s40 = ssub.s32 %s27, %s39
      %p41 = scmp.eq.s32.totalorder %s40, 0
      %s43 = sadd.s32 %s42, 1
      %s44 = scalar_select %p41, %s42, %s43
      %p47 = pneg %p41
      %p48 = scmp.eq.s32.totalorder %s20, 1
      %p49 = por %p47, %p48
      %p50 = scmp.ne.s32.totalorder %s42, %s45
      %p51 = scmp.eq.s32.totalorder %s20, 0
      %p52 = por %p50, %p51
      %p53 = scmp.ne.s32.totalorder %s42, %s45
      %p54 = scmp.eq.s32.totalorder %s25, 1
      %p55 = por %p53, %p54
      %p56 = scmp.ne.s32.totalorder %s45, %s46
      %p57 = scmp.eq.s32.totalorder %s25, 0
      %p58 = por %p56, %p57
      %p59 = scmp.ne.s32.totalorder %s45, %s46
      %p60 = scmp.eq.s32.totalorder %s26, 1
      %p61 = por %p59, %p60
      %p63 = scmp.ne.s32.totalorder %s46, %s62
      %p64 = scmp.eq.s32.totalorder %s26, 0
      %p65 = por %p63, %p64
      %s66 = ssub.s32 %s28, %s35
      %p67 = scmp.eq.s32.totalorder %s66, 0
      %s69 = sadd.s32 %s68, 1
      %s70 = scalar_select %p67, %s68, %s69
      %p73 = pneg %p67
      %p74 = scmp.eq.s32.totalorder %s20, 1
      %p75 = por %p73, %p74
      %p76 = scmp.ne.s32.totalorder %s68, %s71
      %p77 = scmp.eq.s32.totalorder %s20, 0
      %p78 = por %p76, %p77
      %p79 = scmp.ne.s32.totalorder %s68, %s71
      %p80 = scmp.eq.s32.totalorder %s25, 1
      %p81 = por %p79, %p80
      %p82 = scmp.ne.s32.totalorder %s71, %s72
      %p83 = scmp.eq.s32.totalorder %s25, 0
      %p84 = por %p82, %p83
      %p85 = scmp.ne.s32.totalorder %s71, %s72
      %p86 = scmp.eq.s32.totalorder %s26, 1
      %p87 = por %p85, %p86
      %p89 = scmp.ne.s32.totalorder %s72, %s88
      %p90 = scmp.eq.s32.totalorder %s26, 0
      %p91 = por %p89, %p90
      %s93 = sadd.s32 %s92, 1
      %p96 = scmp.eq.s32.totalorder %s20, 1
      %p97 = scmp.ne.s32.totalorder %s92, %s94
      %p98 = scmp.eq.s32.totalorder %s20, 0
      %p99 = por %p97, %p98
      %p100 = scmp.ne.s32.totalorder %s92, %s94
      %p101 = scmp.eq.s32.totalorder %s25, 1
      %p102 = por %p100, %p101
      %p103 = scmp.ne.s32.totalorder %s94, %s95
      %p104 = scmp.eq.s32.totalorder %s25, 0
      %p105 = por %p103, %p104
      %p106 = scmp.ne.s32.totalorder %s94, %s95
      %p107 = scmp.eq.s32.totalorder %s26, 1
      %p108 = por %p106, %p107
      %p110 = scmp.ne.s32.totalorder %s95, %s109
      %p111 = scmp.eq.s32.totalorder %s26, 0
      %p112 = por %p110, %p111
      %s114 = sadd.s32 %s113, 1
      %p117 = scmp.eq.s32.totalorder %s20, 1
      %p118 = scmp.ne.s32.totalorder %s113, %s115
      %p119 = scmp.eq.s32.totalorder %s20, 0
      %p120 = por %p118, %p119
      %p121 = scmp.ne.s32.totalorder %s113, %s115
      %p122 = scmp.eq.s32.totalorder %s25, 1
      %p123 = por %p121, %p122
      %p124 = scmp.ne.s32.totalorder %s115, %s116
      %p125 = scmp.eq.s32.totalorder %s25, 0
      %p126 = por %p124, %p125
      %p127 = scmp.ne.s32.totalorder %s115, %s116
      %p128 = scmp.eq.s32.totalorder %s26, 1
      %p129 = por %p127, %p128
      %p131 = scmp.ne.s32.totalorder %s116, %s130
      %p132 = scmp.eq.s32.totalorder %s26, 0
      %p133 = por %p131, %p132
      %s135 = sadd.s32 %s134, 1
      %p138 = scmp.eq.s32.totalorder %s20, 1
      %p139 = scmp.ne.s32.totalorder %s134, %s136
      %p140 = scmp.eq.s32.totalorder %s20, 0
      %p141 = por %p139, %p140
      %p142 = scmp.ne.s32.totalorder %s134, %s136
      %p143 = scmp.eq.s32.totalorder %s25, 1
      %p144 = por %p142, %p143
      %p145 = scmp.ne.s32.totalorder %s136, %s137
      %p146 = scmp.eq.s32.totalorder %s25, 0
      %p147 = por %p145, %p146
      %p148 = scmp.ne.s32.totalorder %s136, %s137
      %p149 = scmp.eq.s32.totalorder %s26, 1
      %p150 = por %p148, %p149
      %p152 = scmp.ne.s32.totalorder %s137, %s151
      %p153 = scmp.eq.s32.totalorder %s26, 0
      %p154 = por %p152, %p153
      %s156 = sadd.s32 %s155, 1
      %p159 = scmp.eq.s32.totalorder %s20, 1
      %p160 = scmp.ne.s32.totalorder %s155, %s157
      %p161 = scmp.eq.s32.totalorder %s20, 0
      %p162 = por %p160, %p161
      %p163 = scmp.ne.s32.totalorder %s155, %s157
      %p164 = scmp.eq.s32.totalorder %s25, 1
      %p165 = por %p163, %p164
      %p166 = scmp.ne.s32.totalorder %s157, %s158
      %p167 = scmp.eq.s32.totalorder %s25, 0
      %p168 = por %p166, %p167
      %p169 = scmp.ne.s32.totalorder %s157, %s158
      %p170 = scmp.eq.s32.totalorder %s26, 1
      %p171 = por %p169, %p170
      %p173 = scmp.ne.s32.totalorder %s158, %s172
      %p174 = scmp.eq.s32.totalorder %s26, 0
      %p175 = por %p173, %p174
      %s176 = ssub.s32 %s27, %s39
      %p177 = scmp.eq.s32.totalorder %s176, 0
      %s179 = sadd.s32 %s178, 1
      %s180 = scalar_select %p177, %s178, %s179
      %p183 = pneg %p177
      %p184 = scmp.eq.s32.totalorder %s20, 1
      %p185 = por %p183, %p184
      %p186 = scmp.ne.s32.totalorder %s178, %s181
      %p187 = scmp.eq.s32.totalorder %s20, 0
      %p188 = por %p186, %p187
      %p189 = scmp.ne.s32.totalorder %s178, %s181
      %p190 = scmp.eq.s32.totalorder %s25, 1
      %p191 = por %p189, %p190
      %p192 = scmp.ne.s32.totalorder %s181, %s182
      %p193 = scmp.eq.s32.totalorder %s25, 0
      %p194 = por %p192, %p193
      %p195 = scmp.ne.s32.totalorder %s181, %s182
      %p196 = scmp.eq.s32.totalorder %s26, 1
      %p197 = por %p195, %p196
      %p199 = scmp.ne.s32.totalorder %s182, %s198
      %p200 = scmp.eq.s32.totalorder %s26, 0
      %p201 = por %p199, %p200
      %p202 = scmp.le.s32.totalorder 1, %s20
      %p203 = scmp.lt.s32.totalorder %s20, 3
      %p204 = pnand %p202, %p203
      %p205 = pneg %p204
      // Predicated region
      $region9: #{tpu_custom_call.1} parent=5 // pred_check
        _
      $region10: #{tpu_custom_call.1} parent=5 // pred_check_branch
        %207 = sbr.rel (%p204) target = $region12
      $region11: #{tpu_custom_call.1} parent=5 // pred_region
        %s208 = ssub.s32 %s20, 1
        // Predicated region
        $region13: #{tpu_custom_call.1} parent=11 // pred_check
          %p209 = pneg %p84
        $region14: #{tpu_custom_call.1} parent=11 // pred_check_branch
          %211 = sbr.rel (%p209) target = $region16
        $region15: #{tpu_custom_call.1} parent=11 // pred_region
          %s212 = smul.u32 16, %s30
          %s214 = ssub.s32 4096, 4096
          %215 = vsyncadd [#allocation7], %s214
          %s216 = smul.addr %s212, 2
          %s217 = smul.addr %s216, 128
          %s218 = scalar_lea.hbm %s1, %s217
          %s219 = sshll.u32 [#allocation6], 4
          %s220 = int_to_ptr.vmem [resolvable:$true] %s219
          %225 = dma.hbm_to_vmem [thread:$0]  %s218, 4096, %s220, [#allocation7], 128, 128, 8
        $region16: #{tpu_custom_call.1} parent=11 // pred_fallthru
          _
        // Predicated region
        $region17: #{tpu_custom_call.1} parent=11 // pred_check
          %p226 = pneg %p105
        $region18: #{tpu_custom_call.1} parent=11 // pred_check_branch
          %228 = sbr.rel (%p226) target = $region20
        $region19: #{tpu_custom_call.1} parent=11 // pred_region
          %s230 = ssub.s32 256, 256
          %231 = vsyncadd [#allocation7], %s230
          %s232 = sshll.u32 [#allocation8], 4
          %s233 = int_to_ptr.vmem [resolvable:$true] %s232
          %238 = dma.hbm_to_vmem [thread:$0]  %s2, 256, %s233, [#allocation7], 128, 128, 8
        $region20: #{tpu_custom_call.1} parent=11 // pred_fallthru
          _
        // Predicated region
        $region21: #{tpu_custom_call.1} parent=11 // pred_check
          %p239 = pneg %p126
        $region22: #{tpu_custom_call.1} parent=11 // pred_check_branch
          %241 = sbr.rel (%p239) target = $region24
        $region23: #{tpu_custom_call.1} parent=11 // pred_region
          %s243 = ssub.s32 256, 256
          %244 = vsyncadd [#allocation10], %s243
          %s245 = sshll.u32 [#allocation9], 4
          %s246 = int_to_ptr.vmem [resolvable:$true] %s245
          %251 = dma.hbm_to_vmem [thread:$0]  %s3, 256, %s246, [#allocation10], 128, 128, 8
        $region24: #{tpu_custom_call.1} parent=11 // pred_fallthru
          _
        // Predicated region
        $region25: #{tpu_custom_call.1} parent=11 // pred_check
          %p252 = pneg %p147
        $region26: #{tpu_custom_call.1} parent=11 // pred_check_branch
          %254 = sbr.rel (%p252) target = $region28
        $region27: #{tpu_custom_call.1} parent=11 // pred_region
          _
        $region28: #{tpu_custom_call.1} parent=11 // pred_fallthru
          _
        // Predicated region
        $region29: #{tpu_custom_call.1} parent=11 // pred_check
          %p255 = pneg %p168
        $region30: #{tpu_custom_call.1} parent=11 // pred_check_branch
          %257 = sbr.rel (%p255) target = $region32
        $region31: #{tpu_custom_call.1} parent=11 // pred_region
          %s259 = ssub.s32 2048, 2048
          %260 = vsyncadd [#allocation10], %s259
          %s261 = sshll.u32 [#allocation11], 4
          %s262 = int_to_ptr.vmem [resolvable:$true] %s261
          %267 = dma.hbm_to_vmem [thread:$0]  %s5, 2048, %s262, [#allocation10], 128, 128, 8
        $region32: #{tpu_custom_call.1} parent=11 // pred_fallthru
          _
      $region12: #{tpu_custom_call.1} parent=5 // pred_fallthru
        _
      %p268 = scmp.lt.s32.totalorder %s20, 2
      // Predicated region
      $region33: #{tpu_custom_call.1} parent=5 // pred_check
        %p269 = pneg %p268
      $region34: #{tpu_custom_call.1} parent=5 // pred_check_branch
        %271 = sbr.rel (%p269) target = $region36
      $region35: #{tpu_custom_call.1} parent=5 // pred_region
        // Predicated region
        $region37: #{tpu_custom_call.1} parent=35 // pred_check
          %p272 = pneg %p52
        $region38: #{tpu_custom_call.1} parent=35 // pred_check_branch
          %274 = sbr.rel (%p272) target = $region40
        $region39: #{tpu_custom_call.1} parent=35 // pred_region
          %s275 = sand.u32 %s42, 1
          %s276 = scalar_lea.sflag [#allocation4], %s275
          %s277 = sand.u32 %s42, 1
          %s278 = smul.addr %s277, 16
          %s279 = scalar_lea.vmem [#allocation3], %s278
          %s281 = ssub.s32 256, 256
          %282 = vsyncadd %s276, %s281
          %s283 = smul.addr %s27, 2
          %s284 = smul.addr %s283, 128
          %s285 = scalar_lea.hbm %s0, %s284
          %s286 = sshll.u32 %s279, 4
          %s287 = int_to_ptr.vmem [resolvable:$true] %s286
          %292 = dma.hbm_to_vmem [thread:$0]  %s285, 256, %s287, %s276, 128, 128, 8
        $region40: #{tpu_custom_call.1} parent=35 // pred_fallthru
          _
      $region36: #{tpu_custom_call.1} parent=5 // pred_fallthru
        _
      %p293 = scmp.le.s32.totalorder 1, %s20
      %p294 = scmp.lt.s32.totalorder %s20, 3
      %p295 = pnand %p293, %p294
      %p296 = pneg %p295
      // Predicated region
      $region41: #{tpu_custom_call.1} parent=5 // pred_check
        _
      $region42: #{tpu_custom_call.1} parent=5 // pred_check_branch
        %298 = sbr.rel (%p295) target = $region44
      $region43: #{tpu_custom_call.1} parent=5 // pred_region
        %s299 = ssub.s32 %s20, 1
        %s300 = sand.u32 %s45, 1
        %s301 = scalar_lea.sflag [#allocation4], %s300
        %s302 = sand.u32 %s45, 1
        %s303 = smul.addr %s302, 16
        %s304 = scalar_lea.vmem [#allocation3], %s303
        // Predicated region
        $region45: #{tpu_custom_call.1} parent=43 // pred_check
          %p305 = pneg %p58
        $region46: #{tpu_custom_call.1} parent=43 // pred_check_branch
          %307 = sbr.rel (%p305) target = $region48
        $region47: #{tpu_custom_call.1} parent=43 // pred_region
          %308 = dma.done %s301, 256
        $region48: #{tpu_custom_call.1} parent=43 // pred_fallthru
          _
        // Predicated region
        $region49: #{tpu_custom_call.1} parent=43 // pred_check
          %p309 = pneg %p84
        $region50: #{tpu_custom_call.1} parent=43 // pred_check_branch
          %311 = sbr.rel (%p309) target = $region52
        $region51: #{tpu_custom_call.1} parent=43 // pred_region
          %312 = dma.done [#allocation7], 4096
        $region52: #{tpu_custom_call.1} parent=43 // pred_fallthru
          _
        // Predicated region
        $region53: #{tpu_custom_call.1} parent=43 // pred_check
          %p313 = pneg %p105
        $region54: #{tpu_custom_call.1} parent=43 // pred_check_branch
          %315 = sbr.rel (%p313) target = $region56
        $region55: #{tpu_custom_call.1} parent=43 // pred_region
          %316 = dma.done [#allocation7], 256
        $region56: #{tpu_custom_call.1} parent=43 // pred_fallthru
          _
        // Predicated region
        $region57: #{tpu_custom_call.1} parent=43 // pred_check
          %p317 = pneg %p126
        $region58: #{tpu_custom_call.1} parent=43 // pred_check_branch
          %319 = sbr.rel (%p317) target = $region60
        $region59: #{tpu_custom_call.1} parent=43 // pred_region
          %320 = dma.done [#allocation10], 256
        $region60: #{tpu_custom_call.1} parent=43 // pred_fallthru
          _
        // Predicated region
        $region61: #{tpu_custom_call.1} parent=43 // pred_check
          %p321 = pneg %p168
        $region62: #{tpu_custom_call.1} parent=43 // pred_check_branch
          %323 = sbr.rel (%p321) target = $region64
        $region63: #{tpu_custom_call.1} parent=43 // pred_region
          %324 = dma.done [#allocation10], 2048
        $region64: #{tpu_custom_call.1} parent=43 // pred_fallthru
          _
        %s325 = sand.u32 %s45, 1
        %s326 = scalar_lea.sflag [#allocation4], %s325
        %s327 = sand.u32 %s45, 1
        %s328 = smul.addr %s327, 16
        %s329 = scalar_lea.vmem [#allocation3], %s328
        %p330 = pneg %p58
        %p331 = pneg %p55
        %p332 = pneg %p84
        %p333 = pneg %p81
        %p334 = pneg %p105
        %p335 = pneg %p102
        %p336 = pneg %p126
        %p337 = pneg %p123
        %p338 = pneg %p147
        %p339 = pneg %p144
        %p340 = pneg %p168
        %p341 = pneg %p165
        %p342 = pneg %p194
        %p343 = pneg %p191
        %s344 = sand.u32 %s181, 1
        %s345 = scalar_lea.sflag [#allocation5], %s344
        %s346 = sand.u32 %s181, 1
        %s347 = smul.addr %s346, 16
        %s348 = scalar_lea.vmem [#allocation12], %s347
        %s349 = smul.u32 16, %s30
        %p350 = scmp.eq.s32.totalorder %s30, 0
        // Predicated region
        $region65: #{tpu_custom_call.1} parent=43 // pred_check
          %p351 = pneg %p350
        $region66: #{tpu_custom_call.1} parent=43 // pred_check_branch
          %353 = sbr.rel (%p351) target = $region68
        $region67: #{tpu_custom_call.1} parent=43 // pred_region
          %354 = vst [vmem:[#allocation2] sm:$0xff] 0.0
          %355 = vst [vmem:[#allocation2 + $0x8] sm:$0xff] 0.0
        $region68: #{tpu_custom_call.1} parent=43 // pred_fallthru
          _
        %s356 = smul.u32 %s30, 16
        %v357 = vld [vmem:[#allocation2] sm:$0xff]
        %v358 = vld [vmem:[#allocation2 + $0x8] sm:$0xff]
        %s359 = scalar_lea.vmem %s304, %s356 [#allocation3]
        %v360 = vld [vmem:[%s359] sm:$0x1]
        %v361 = vld [vmem:[#allocation6] sm:$0xff]
        %v362 = vld [vmem:[#allocation6 + $0x8] sm:$0xff]
        %v363 = vlaneseq
        %v364 = vshrl.u32 %v363, 7
        %v365 = vsub.s32 0, %v364
        %v366 = vrot.slane %v360, %v365
        %v367 = vmul.f32 %v366, %v361
        %v368 = vmul.f32 %v366, %v362
        %v369 = vadd.f32 %v357, %v367
        %v370 = vadd.f32 %v358, %v368
        %s371 = sadd.s32 %s356, 1
        %s372 = scalar_lea.vmem %s304, %s371 [#allocation3]
        %v373 = vld [vmem:[%s372] sm:$0x1]
        %s374 = scalar_lea.vmem [#allocation6], 16
        %v375 = vld [vmem:[%s374] sm:$0xff]
        %v376 = vld [vmem:[%s374 + $0x8] sm:$0xff]
        %v377 = vlaneseq
        %v378 = vshrl.u32 %v377, 7
        %v379 = vsub.s32 0, %v378
        %v380 = vrot.slane %v373, %v379
        %v381 = vmul.f32 %v380, %v375
        %v382 = vmul.f32 %v380, %v376
        %v383 = vadd.f32 %v369, %v381
        %v384 = vadd.f32 %v370, %v382
        %s385 = sadd.s32 %s356, 2
        %s386 = scalar_lea.vmem %s304, %s385 [#allocation3]
        %v387 = vld [vmem:[%s386] sm:$0x1]
        %s388 = scalar_lea.vmem [#allocation6], 32
        %v389 = vld [vmem:[%s388] sm:$0xff]
        %v390 = vld [vmem:[%s388 + $0x8] sm:$0xff]
        %v391 = vlaneseq
        %v392 = vshrl.u32 %v391, 7
        %v393 = vsub.s32 0, %v392
        %v394 = vrot.slane %v387, %v393
        %v395 = vmul.f32 %v394, %v389
        %v396 = vmul.f32 %v394, %v390
        %v397 = vadd.f32 %v383, %v395
        %v398 = vadd.f32 %v384, %v396
        %s399 = sadd.s32 %s356, 3
        %s400 = scalar_lea.vmem %s304, %s399 [#allocation3]
        %v401 = vld [vmem:[%s400] sm:$0x1]
        %s402 = scalar_lea.vmem [#allocation6], 48
        %v403 = vld [vmem:[%s402] sm:$0xff]
        %v404 = vld [vmem:[%s402 + $0x8] sm:$0xff]
        %v405 = vlaneseq
        %v406 = vshrl.u32 %v405, 7
        %v407 = vsub.s32 0, %v406
        %v408 = vrot.slane %v401, %v407
        %v409 = vmul.f32 %v408, %v403
        %v410 = vmul.f32 %v408, %v404
        %v411 = vadd.f32 %v397, %v409
        %v412 = vadd.f32 %v398, %v410
        %s413 = sadd.s32 %s356, 4
        %s414 = scalar_lea.vmem %s304, %s413 [#allocation3]
        %v415 = vld [vmem:[%s414] sm:$0x1]
        %s416 = scalar_lea.vmem [#allocation6], 64
        %v417 = vld [vmem:[%s416] sm:$0xff]
        %v418 = vld [vmem:[%s416 + $0x8] sm:$0xff]
        %v419 = vlaneseq
        %v420 = vshrl.u32 %v419, 7
        %v421 = vsub.s32 0, %v420
        %v422 = vrot.slane %v415, %v421
        %v423 = vmul.f32 %v422, %v417
        %v424 = vmul.f32 %v422, %v418
        %v425 = vadd.f32 %v411, %v423
        %v426 = vadd.f32 %v412, %v424
        %s427 = sadd.s32 %s356, 5
        %s428 = scalar_lea.vmem %s304, %s427 [#allocation3]
        %v429 = vld [vmem:[%s428] sm:$0x1]
        %s430 = scalar_lea.vmem [#allocation6], 80
        %v431 = vld [vmem:[%s430] sm:$0xff]
        %v432 = vld [vmem:[%s430 + $0x8] sm:$0xff]
        %v433 = vlaneseq
        %v434 = vshrl.u32 %v433, 7
        %v435 = vsub.s32 0, %v434
        %v436 = vrot.slane %v429, %v435
        %v437 = vmul.f32 %v436, %v431
        %v438 = vmul.f32 %v436, %v432
        %v439 = vadd.f32 %v425, %v437
        %v440 = vadd.f32 %v426, %v438
        %s441 = sadd.s32 %s356, 6
        %s442 = scalar_lea.vmem %s304, %s441 [#allocation3]
        %v443 = vld [vmem:[%s442] sm:$0x1]
        %s444 = scalar_lea.vmem [#allocation6], 96
        %v445 = vld [vmem:[%s444] sm:$0xff]
        %v446 = vld [vmem:[%s444 + $0x8] sm:$0xff]
        %v447 = vlaneseq
        %v448 = vshrl.u32 %v447, 7
        %v449 = vsub.s32 0, %v448
        %v450 = vrot.slane %v443, %v449
        %v451 = vmul.f32 %v450, %v445
        %v452 = vmul.f32 %v450, %v446
        %v453 = vadd.f32 %v439, %v451
        %v454 = vadd.f32 %v440, %v452
        %s455 = sadd.s32 %s356, 7
        %s456 = scalar_lea.vmem %s304, %s455 [#allocation3]
        %v457 = vld [vmem:[%s456] sm:$0x1]
        %s458 = scalar_lea.vmem [#allocation6], 112
        %v459 = vld [vmem:[%s458] sm:$0xff]
        %v460 = vld [vmem:[%s458 + $0x8] sm:$0xff]
        %v461 = vlaneseq
        %v462 = vshrl.u32 %v461, 7
        %v463 = vsub.s32 0, %v462
        %v464 = vrot.slane %v457, %v463
        %v465 = vmul.f32 %v464, %v459
        %v466 = vmul.f32 %v464, %v460
        %v467 = vadd.f32 %v453, %v465
        %v468 = vadd.f32 %v454, %v466
        %s469 = sadd.s32 %s356, 8
        %s470 = scalar_lea.vmem %s304, %s469 [#allocation3]
        %v471 = vld [vmem:[%s470] sm:$0x1]
        %s472 = scalar_lea.vmem [#allocation6], 128
        %v473 = vld [vmem:[%s472] sm:$0xff]
        %v474 = vld [vmem:[%s472 + $0x8] sm:$0xff]
        %v475 = vlaneseq
        %v476 = vshrl.u32 %v475, 7
        %v477 = vsub.s32 0, %v476
        %v478 = vrot.slane %v471, %v477
        %v479 = vmul.f32 %v478, %v473
        %v480 = vmul.f32 %v478, %v474
        %v481 = vadd.f32 %v467, %v479
        %v482 = vadd.f32 %v468, %v480
        %s483 = sadd.s32 %s356, 9
        %s484 = scalar_lea.vmem %s304, %s483 [#allocation3]
        %v485 = vld [vmem:[%s484] sm:$0x1]
        %s486 = scalar_lea.vmem [#allocation6], 144
        %v487 = vld [vmem:[%s486] sm:$0xff]
        %v488 = vld [vmem:[%s486 + $0x8] sm:$0xff]
        %v489 = vlaneseq
        %v490 = vshrl.u32 %v489, 7
        %v491 = vsub.s32 0, %v490
        %v492 = vrot.slane %v485, %v491
        %v493 = vmul.f32 %v492, %v487
        %v494 = vmul.f32 %v492, %v488
        %v495 = vadd.f32 %v481, %v493
        %v496 = vadd.f32 %v482, %v494
        %s497 = sadd.s32 %s356, 10
        %s498 = scalar_lea.vmem %s304, %s497 [#allocation3]
        %v499 = vld [vmem:[%s498] sm:$0x1]
        %s500 = scalar_lea.vmem [#allocation6], 160
        %v501 = vld [vmem:[%s500] sm:$0xff]
        %v502 = vld [vmem:[%s500 + $0x8] sm:$0xff]
        %v503 = vlaneseq
        %v504 = vshrl.u32 %v503, 7
        %v505 = vsub.s32 0, %v504
        %v506 = vrot.slane %v499, %v505
        %v507 = vmul.f32 %v506, %v501
        %v508 = vmul.f32 %v506, %v502
        %v509 = vadd.f32 %v495, %v507
        %v510 = vadd.f32 %v496, %v508
        %s511 = sadd.s32 %s356, 11
        %s512 = scalar_lea.vmem %s304, %s511 [#allocation3]
        %v513 = vld [vmem:[%s512] sm:$0x1]
        %s514 = scalar_lea.vmem [#allocation6], 176
        %v515 = vld [vmem:[%s514] sm:$0xff]
        %v516 = vld [vmem:[%s514 + $0x8] sm:$0xff]
        %v517 = vlaneseq
        %v518 = vshrl.u32 %v517, 7
        %v519 = vsub.s32 0, %v518
        %v520 = vrot.slane %v513, %v519
        %v521 = vmul.f32 %v520, %v515
        %v522 = vmul.f32 %v520, %v516
        %v523 = vadd.f32 %v509, %v521
        %v524 = vadd.f32 %v510, %v522
        %s525 = sadd.s32 %s356, 12
        %s526 = scalar_lea.vmem %s304, %s525 [#allocation3]
        %v527 = vld [vmem:[%s526] sm:$0x1]
        %s528 = scalar_lea.vmem [#allocation6], 192
        %v529 = vld [vmem:[%s528] sm:$0xff]
        %v530 = vld [vmem:[%s528 + $0x8] sm:$0xff]
        %v531 = vlaneseq
        %v532 = vshrl.u32 %v531, 7
        %v533 = vsub.s32 0, %v532
        %v534 = vrot.slane %v527, %v533
        %v535 = vmul.f32 %v534, %v529
        %v536 = vmul.f32 %v534, %v530
        %v537 = vadd.f32 %v523, %v535
        %v538 = vadd.f32 %v524, %v536
        %s539 = sadd.s32 %s356, 13
        %s540 = scalar_lea.vmem %s304, %s539 [#allocation3]
        %v541 = vld [vmem:[%s540] sm:$0x1]
        %s542 = scalar_lea.vmem [#allocation6], 208
        %v543 = vld [vmem:[%s542] sm:$0xff]
        %v544 = vld [vmem:[%s542 + $0x8] sm:$0xff]
        %v545 = vlaneseq
        %v546 = vshrl.u32 %v545, 7
        %v547 = vsub.s32 0, %v546
        %v548 = vrot.slane %v541, %v547
        %v549 = vmul.f32 %v548, %v543
        %v550 = vmul.f32 %v548, %v544
        %v551 = vadd.f32 %v537, %v549
        %v552 = vadd.f32 %v538, %v550
        %s553 = sadd.s32 %s356, 14
        %s554 = scalar_lea.vmem %s304, %s553 [#allocation3]
        %v555 = vld [vmem:[%s554] sm:$0x1]
        %s556 = scalar_lea.vmem [#allocation6], 224
        %v557 = vld [vmem:[%s556] sm:$0xff]
        %v558 = vld [vmem:[%s556 + $0x8] sm:$0xff]
        %v559 = vlaneseq
        %v560 = vshrl.u32 %v559, 7
        %v561 = vsub.s32 0, %v560
        %v562 = vrot.slane %v555, %v561
        %v563 = vmul.f32 %v562, %v557
        %v564 = vmul.f32 %v562, %v558
        %v565 = vadd.f32 %v551, %v563
        %v566 = vadd.f32 %v552, %v564
        %s567 = sadd.s32 %s356, 15
        %s568 = scalar_lea.vmem %s304, %s567 [#allocation3]
        %v569 = vld [vmem:[%s568] sm:$0x1]
        %s570 = scalar_lea.vmem [#allocation6], 240
        %v571 = vld [vmem:[%s570] sm:$0xff]
        %v572 = vld [vmem:[%s570 + $0x8] sm:$0xff]
        %v573 = vlaneseq
        %v574 = vshrl.u32 %v573, 7
        %v575 = vsub.s32 0, %v574
        %v576 = vrot.slane %v569, %v575
        %v577 = vmul.f32 %v576, %v571
        %v578 = vmul.f32 %v576, %v572
        %v579 = vadd.f32 %v565, %v577
        %v580 = vadd.f32 %v566, %v578
        %s581 = sadd.s32 %s30, 1
        %p582 = scmp.lt.s32.totalorder %s581, 1
        // Predicated region
        $region69: #{tpu_custom_call.1} parent=43 // pred_check
          %p583 = pneg %p582
        $region70: #{tpu_custom_call.1} parent=43 // pred_check_branch
          %585 = sbr.rel (%p583) target = $region72
        $region71: #{tpu_custom_call.1} parent=43 // pred_region
          %586 = vst [vmem:[#allocation2] sm:$0xff] %v579
          %587 = vst [vmem:[#allocation2 + $0x8] sm:$0xff] %v580
        $region72: #{tpu_custom_call.1} parent=43 // pred_fallthru
          _
        %p588 = scmp.eq.s32.totalorder %s581, 1
        // Predicated region
        $region73: #{tpu_custom_call.1} parent=43 // pred_check
          %p589 = pneg %p588
        $region74: #{tpu_custom_call.1} parent=43 // pred_check_branch
          %591 = sbr.rel (%p589) target = $region76
        $region75: #{tpu_custom_call.1} parent=43 // pred_region
          %v592 = vld [vmem:[%s304 + $0xf] sm:$0x1]
          %v593 = vld [vmem:[#allocation8] sm:$0xff]
          %v594 = vld [vmem:[#allocation8 + $0x8] sm:$0xff]
          %v595 = vadd.f32 %v579, %v593
          %v596 = vadd.f32 %v580, %v594
          %v597 = vld [vmem:[#allocation9] sm:$0xff]
          %v598 = vld [vmem:[#allocation9 + $0x8] sm:$0xff]
          %v599 = vlaneseq
          %v600 = vshrl.u32 %v599, 7
          %v601 = vsub.s32 0, %v600
          %v602 = vrot.slane %v592, %v601
          %v603 = vmul.f32 %v602, %v597
          %v604 = vmul.f32 %v602, %v598
          %v605 = vadd.f32 %v595, %v603
          %v606 = vadd.f32 %v596, %v604
          %v607 = vmul.f32 %v606, 2.0
          %v608 = vmul.f32 %v607, 1.442695
          %v609 = vpow.pop %v608
          %v610 = vld [vmem:[#allocation11] sm:$0xff]
          %v611 = vld [vmem:[#allocation11 + $0x8] sm:$0xff]
          %v612 = vld [vmem:[#allocation11 + $0x10] sm:$0xff]
          %v613 = vld [vmem:[#allocation11 + $0x18] sm:$0xff]
          %v614 = vld [vmem:[#allocation11 + $0x20] sm:$0xff]
          %v615 = vld [vmem:[#allocation11 + $0x28] sm:$0xff]
          %v616 = vld [vmem:[#allocation11 + $0x30] sm:$0xff]
          %v617 = vld [vmem:[#allocation11 + $0x38] sm:$0xff]
          %v618 = vld [vmem:[#allocation11 + $0x40] sm:$0xff]
          %v619 = vld [vmem:[#allocation11 + $0x48] sm:$0xff]
          %v620 = vld [vmem:[#allocation11 + $0x50] sm:$0xff]
          %v621 = vld [vmem:[#allocation11 + $0x58] sm:$0xff]
          %v622 = vld [vmem:[#allocation11 + $0x60] sm:$0xff]
          %v623 = vld [vmem:[#allocation11 + $0x68] sm:$0xff]
          %v624 = vld [vmem:[#allocation11 + $0x70] sm:$0xff]
          %v625 = vld [vmem:[#allocation11 + $0x78] sm:$0xff]
          %626 = vmatprep.subr.mxu0 0.0
          %627 = vmatpush1.msra.mxu0 %v610
          %628 = vmatprep.subr.mxu0 0.0
          %629 = vmatpush1.msra.mxu0 %v611
          %630 = vmatprep.subr.mxu0 0.0
          %631 = vmatpush1.msra.mxu0 %v612
          %632 = vmatprep.subr.mxu0 0.0
          %633 = vmatpush1.msra.mxu0 %v613
          %634 = vmatprep.subr.mxu0 0.0
          %635 = vmatpush1.msra.mxu0 %v614
          %636 = vmatprep.subr.mxu0 0.0
          %637 = vmatpush1.msra.mxu0 %v615
          %638 = vmatprep.subr.mxu0 0.0
          %639 = vmatpush1.msra.mxu0 %v616
          %640 = vmatprep.subr.mxu0 0.0
          %641 = vmatpush1.msra.mxu0 %v617
          %642 = vmatprep.subr.mxu0 0.0
          %643 = vmatpush1.msra.mxu0 %v618
          %644 = vmatprep.subr.mxu0 0.0
          %645 = vmatpush1.msra.mxu0 %v619
          %646 = vmatprep.subr.mxu0 0.0
          %647 = vmatpush1.msra.mxu0 %v620
          %648 = vmatprep.subr.mxu0 0.0
          %649 = vmatpush1.msra.mxu0 %v621
          %650 = vmatprep.subr.mxu0 0.0
          %651 = vmatpush1.msra.mxu0 %v622
          %652 = vmatprep.subr.mxu0 0.0
          %653 = vmatpush1.msra.mxu0 %v623
          %654 = vmatprep.subr.mxu0 0.0
          %655 = vmatpush1.msra.mxu0 %v624
          %656 = vmatprep.subr.mxu0 0.0
          %657 = vmatpush1.msra.mxu0 %v625
          %658 = vmatprep.subr.mxu0 0.0
          %659 = vmatpush1.msra.mxu0 0.0
          %660 = vmatprep.subr.mxu0 0.0
          %661 = vmatpush1.msra.mxu0 0.0
          %662 = vmatprep.subr.mxu0 0.0
          %663 = vmatpush1.msra.mxu0 0.0
          %664 = vmatprep.subr.mxu0 0.0
          %665 = vmatpush1.msra.mxu0 0.0
          %666 = vmatprep.subr.mxu0 0.0
          %667 = vmatpush1.msra.mxu0 0.0
          %668 = vmatprep.subr.mxu0 0.0
          %669 = vmatpush1.msra.mxu0 0.0
          %670 = vmatprep.subr.mxu0 0.0
          %671 = vmatpush1.msra.mxu0 0.0
          %672 = vmatprep.subr.mxu0 0.0
          %673 = vmatpush1.msra.mxu0 0.0
          %674 = vmatprep.subr.mxu0 0.0
          %675 = vmatpush1.msra.mxu0 0.0
          %676 = vmatprep.subr.mxu0 0.0
          %677 = vmatpush1.msra.mxu0 0.0
          %678 = vmatprep.subr.mxu0 0.0
          %679 = vmatpush1.msra.mxu0 0.0
          %680 = vmatprep.subr.mxu0 0.0
          %681 = vmatpush1.msra.mxu0 0.0
          %682 = vmatprep.subr.mxu0 0.0
          %683 = vmatpush1.msra.mxu0 0.0
          %684 = vmatprep.subr.mxu0 0.0
          %685 = vmatpush1.msra.mxu0 0.0
          %686 = vmatprep.subr.mxu0 0.0
          %687 = vmatpush1.msra.mxu0 0.0
          %688 = vmatprep.subr.mxu0 0.0
          %689 = vmatpush1.msra.mxu0 0.0
          %690 = vmatprep.mubr.f32.mxu0 0.0
          %691 = vmatmul.mubr.f32.gmra.mrb[0].mxu0 %v605
          %v692 = vpop.f32.mrb[0].mxu0
          %v693 = vadd.f32 0.0, %v692
          %v694 = vpop.f32.mrb[0].mxu0
          %695 = vdwg.mxu0
          %696 = vmatprep.subr.mxu0 0.0
          %697 = vmatpush1.msra.mxu0 %v610
          %698 = vmatprep.subr.mxu0 0.0
          %699 = vmatpush1.msra.mxu0 %v611
          %700 = vmatprep.subr.mxu0 0.0
          %701 = vmatpush1.msra.mxu0 %v612
          %702 = vmatprep.subr.mxu0 0.0
          %703 = vmatpush1.msra.mxu0 %v613
          %704 = vmatprep.subr.mxu0 0.0
          %705 = vmatpush1.msra.mxu0 %v614
          %706 = vmatprep.subr.mxu0 0.0
          %707 = vmatpush1.msra.mxu0 %v615
          %708 = vmatprep.subr.mxu0 0.0
          %709 = vmatpush1.msra.mxu0 %v616
          %710 = vmatprep.subr.mxu0 0.0
          %711 = vmatpush1.msra.mxu0 %v617
          %712 = vmatprep.subr.mxu0 0.0
          %713 = vmatpush1.msra.mxu0 %v618
          %714 = vmatprep.subr.mxu0 0.0
          %715 = vmatpush1.msra.mxu0 %v619
          %716 = vmatprep.subr.mxu0 0.0
          %717 = vmatpush1.msra.mxu0 %v620
          %718 = vmatprep.subr.mxu0 0.0
          %719 = vmatpush1.msra.mxu0 %v621
          %720 = vmatprep.subr.mxu0 0.0
          %721 = vmatpush1.msra.mxu0 %v622
          %722 = vmatprep.subr.mxu0 0.0
          %723 = vmatpush1.msra.mxu0 %v623
          %724 = vmatprep.subr.mxu0 0.0
          %725 = vmatpush1.msra.mxu0 %v624
          %726 = vmatprep.subr.mxu0 0.0
          %727 = vmatpush1.msra.mxu0 %v625
          %728 = vmatprep.subr.mxu0 0.0
          %729 = vmatpush1.msra.mxu0 0.0
          %730 = vmatprep.subr.mxu0 0.0
          %731 = vmatpush1.msra.mxu0 0.0
          %732 = vmatprep.subr.mxu0 0.0
          %733 = vmatpush1.msra.mxu0 0.0
          %734 = vmatprep.subr.mxu0 0.0
          %735 = vmatpush1.msra.mxu0 0.0
          %736 = vmatprep.subr.mxu0 0.0
          %737 = vmatpush1.msra.mxu0 0.0
          %738 = vmatprep.subr.mxu0 0.0
          %739 = vmatpush1.msra.mxu0 0.0
          %740 = vmatprep.subr.mxu0 0.0
          %741 = vmatpush1.msra.mxu0 0.0
          %742 = vmatprep.subr.mxu0 0.0
          %743 = vmatpush1.msra.mxu0 0.0
          %744 = vmatprep.subr.mxu0 0.0
          %745 = vmatpush1.msra.mxu0 0.0
          %746 = vmatprep.subr.mxu0 0.0
          %747 = vmatpush1.msra.mxu0 0.0
          %748 = vmatprep.subr.mxu0 0.0
          %749 = vmatpush1.msra.mxu0 0.0
          %750 = vmatprep.subr.mxu0 0.0
          %751 = vmatpush1.msra.mxu0 0.0
          %752 = vmatprep.subr.mxu0 0.0
          %753 = vmatpush1.msra.mxu0 0.0
          %754 = vmatprep.subr.mxu0 0.0
          %755 = vmatpush1.msra.mxu0 0.0
          %756 = vmatprep.subr.mxu0 0.0
          %757 = vmatpush1.msra.mxu0 0.0
          %758 = vmatprep.subr.mxu0 0.0
          %759 = vmatpush1.msra.mxu0 0.0
          %760 = vmatprep.mubr.f32.mxu0 0.0
          %761 = vmatmul.mubr.f32.gmra.mrb[0].mxu0 %v609
          %v762 = vpop.f32.mrb[0].mxu0
          %v763 = vadd.f32 0.0, %v762
          %v764 = vpop.f32.mrb[0].mxu0
          %765 = vdwg.mxu0
          %v766 = vld [vmem:[%s4] sm:$0x1]
          %v767 = vsub.f32 1.0, %v766
          %v769 = vlaneseq
          %v770 = vshrl.u32 %v769, 7
          %v771 = vsub.s32 0, %v770
          %v772 = vrot.slane %v766, %v771
          %v774 = vmul.f32 %v772, %v605
          %v776 = vlaneseq
          %v777 = vshrl.u32 %v776, 7
          %v778 = vsub.s32 0, %v777
          %v779 = vrot.slane %v767, %v778
          %v781 = vmul.f32 %v779, %v693
          %v782 = vadd.f32 %v774, %v781
          %v783 = vmul.f32 %v766, %v766
          %v785 = vlaneseq
          %v786 = vshrl.u32 %v785, 7
          %v787 = vsub.s32 0, %v786
          %v788 = vrot.slane %v783, %v787
          %v790 = vmul.f32 %v788, %v609
          %v791 = vmul.f32 %v767, %v767
          %v793 = vlaneseq
          %v794 = vshrl.u32 %v793, 7
          %v795 = vsub.s32 0, %v794
          %v796 = vrot.slane %v791, %v795
          %v798 = vmul.f32 %v796, %v763
          %v799 = vadd.f32 %v790, %v798
          %800 = vst [vmem:[%s348] sm:$0xff] %v782
          %v801 = vlog2.pop %v799
          %v802 = vmul.f32 %v801, 0.6931472
          %v803 = vmul.f32 %v802, 0.5
          %804 = vst [vmem:[%s348 + $0x8] sm:$0xff] %v803
        $region76: #{tpu_custom_call.1} parent=43 // pred_fallthru
          _
        %s805 = sand.u32 %s181, 1
        %s806 = scalar_lea.sflag [#allocation5], %s805
        %s807 = sand.u32 %s181, 1
        %s808 = smul.addr %s807, 16
        %s809 = scalar_lea.vmem [#allocation12], %s808
        // Predicated region
        $region77: #{tpu_custom_call.1} parent=43 // pred_check
          %p810 = pneg %p191
        $region78: #{tpu_custom_call.1} parent=43 // pred_check_branch
          %812 = sbr.rel (%p810) target = $region80
        $region79: #{tpu_custom_call.1} parent=43 // pred_region
          %s814 = ssub.s32 256, 256
          %815 = vsyncadd %s806, %s814
          %s816 = smul.addr %s29, 2
          %s817 = smul.addr %s816, 128
          %s818 = scalar_lea.hbm %s6, %s817
          %s819 = sshll.u32 %s809, 4
          %s820 = int_to_ptr.vmem [resolvable:$true] %s819
          %825 = dma.vmem_to_hbm [thread:$0]  %s820, 256, %s818, %s806, 128, 128, 8
        $region80: #{tpu_custom_call.1} parent=43 // pred_fallthru
          _
      $region44: #{tpu_custom_call.1} parent=5 // pred_fallthru
        _
      %p826 = scmp.le.s32.totalorder 2, %s20
      // Predicated region
      $region81: #{tpu_custom_call.1} parent=5 // pred_check
        %p827 = pneg %p826
      $region82: #{tpu_custom_call.1} parent=5 // pred_check_branch
        %829 = sbr.rel (%p827) target = $region84
      $region83: #{tpu_custom_call.1} parent=5 // pred_region
        %s830 = ssub.s32 %s20, 2
        // Predicated region
        $region85: #{tpu_custom_call.1} parent=83 // pred_check
          %p831 = pneg %p197
        $region86: #{tpu_custom_call.1} parent=83 // pred_check_branch
          %833 = sbr.rel (%p831) target = $region88
        $region87: #{tpu_custom_call.1} parent=83 // pred_region
          %s834 = sand.u32 %s182, 1
          %s835 = scalar_lea.sflag [#allocation5], %s834
          %s836 = sand.u32 %s182, 1
          %s837 = smul.addr %s836, 16
          %s838 = scalar_lea.vmem [#allocation12], %s837
          %839 = dma.done %s835, 256
        $region88: #{tpu_custom_call.1} parent=83 // pred_fallthru
          _
      $region84: #{tpu_custom_call.1} parent=5 // pred_fallthru
        _
    $region6: #{tpu_custom_call.1} parent=1 // loop_footer
      %s24 = sadd.s32 1, %s20
    $region7: #{tpu_custom_call.1} parent=1 // loop_footer_branch
      %19 = sbr.rel target = $region3
    $region8: #{tpu_custom_call.1} parent=1 // loop_exit
      _
    %840 = vsyncpa [#allocation4], 1
    %s841 = scalar_lea.sflag [#allocation4], 1
    %842 = vsyncpa %s841, 1
    %843 = vsyncpa [#allocation7], 1
    %844 = vsyncpa [#allocation10], 1
    %845 = vsyncpa [#allocation5], 1
    %s846 = scalar_lea.sflag [#allocation5], 1
    %847 = vsyncpa %s846, 1

</llo_original>
